<compile_context>
chip_gen: v7x
topology: tpu7x:2x2x1
jax: 0.10.0
libtpu: 0.0.40
codegen_flags: <defaults>
</compile_context>

<pallas_src>
import math

import jax
import jax.numpy as jnp
from jax import lax
from jax.experimental import pallas as pl
from jax.experimental.pallas import tpu as pltpu


def _round_up(x: int, m: int) -> int:
    return ((x + m - 1) // m) * m


def _auto_head_pack(heads: int, dim_head: int, target_width: int = 128) -> int:
    """Largest divisor of `heads` with pack * dim_head <= target_width (>= 1)."""
    hb = min(heads, max(1, target_width // max(dim_head, 1)))
    while heads % hb != 0:
        hb -= 1
    return hb


def _make_attention_kernel(*, n_real, num_groups, heads_per_group, dim_head,
                           tkv, num_kv_chunks, compute_dtype, approx_recip):
    hb = heads_per_group
    dh = dim_head
    mask_val = -1e30  # large finite negative: exp() underflows to exactly 0

    def kernel(q_ref, kT_ref, v_ref, wo_ref, bo_ref, o_ref, m_s, l_s, acc_s, oc_s):
        cdt = compute_dtype
        # Static loop over packed head groups (K/V and weights for all heads resident).
        for g in range(num_groups):
            q_g = q_ref[0, g]                                   # (hb, tq, dh)
            m_s[...] = jnp.full(m_s.shape, -jnp.inf, jnp.float32)
            l_s[...] = jnp.zeros(l_s.shape, jnp.float32)
            acc_s[...] = jnp.zeros(acc_s.shape, jnp.float32)

            # Static in-kernel loop over kv chunks of the VMEM-resident K^T / V.
            # TODO(synk): switch to lax.fori_loop with dynamic pl.ds if num_kv_chunks
            # ever gets large enough for unrolling to hurt compile time.
            for c in range(num_kv_chunks):
                k0 = c * tkv
                kT_c = kT_ref[0, g, :, :, k0:k0 + tkv]          # (hb, dh, tkv)
                v_c = v_ref[0, g, :, k0:k0 + tkv, :]            # (hb, tkv, dh)

                # Scores: canonical (M,K)x(K,N) per packed head, no in-kernel transpose.
                s = jnp.einsum("hqd,hdk->hqk", q_g, kT_c,
                               preferred_element_type=jnp.float32)
                if k0 + tkv > n_real:                           # static tail mask only
                    kv_idx = lax.broadcasted_iota(jnp.int32, s.shape, 2)
                    s = jnp.where(kv_idx < (n_real - k0), s, mask_val)

                # Online softmax (all f32 on VPU/EUP).
                # TODO(synk): if the EUP slot binds on v6e/v7x, compute the exp in
                # bf16 while keeping m/l/acc in f32 (skip on v5e: no bf16 EUP).
                m_prev = m_s[...]
                m_new = jnp.maximum(m_prev, jnp.max(s, axis=-1, keepdims=True))
                alpha = jnp.exp(m_prev - m_new)
                p = jnp.exp(s - m_new)
                l_s[...] = alpha * l_s[...] + jnp.sum(p, axis=-1, keepdims=True)
                acc_s[...] = alpha * acc_s[...] + jnp.einsum(
                    "hqk,hkd->hqd", p.astype(cdt), v_c,
                    preferred_element_type=jnp.float32)
                m_s[...] = m_new

            # Normalize and scatter this group's heads into the (tq, inner) slab.
            out_g = acc_s[...] * pl.reciprocal(l_s[...], approx=approx_recip)
            for j in range(hb):
                col = (g * hb + j) * dh
                oc_s[:, col:col + dh] = out_g[j]

        # Output projection: one (tq, inner) x (inner, dim) MXU matmul (K = inner).
        y = jnp.dot(oc_s[...].astype(cdt), wo_ref[...],
                    preferred_element_type=jnp.float32)
        o_ref[0] = (y + bo_ref[...]).astype(o_ref.dtype)

    return kernel


def attention_pallas(x, w_qkv, b_qkv, w_out, b_out, heads, dim_head, *,
                     compute_dtype=jnp.bfloat16, out_dtype=None,
                     q_tile=256, kv_tile=512, head_pack=None,
                     vmem_limit_bytes=64 * 1024 * 1024):
    """Multi-head self-attention matching the PyTorch `Attention.forward`.

    x:      (b, n, dim)
    w_qkv:  (dim, 3*heads*dim_head)   -- nn.Linear weight stored transposed (in, out)
    b_qkv:  (3*heads*dim_head,)
    w_out:  (heads*dim_head, dim)
    b_out:  (dim,)
    """
    b, n, dim = x.shape
    inner = heads * dim_head
    assert w_qkv.shape == (dim, 3 * inner)
    assert b_qkv.shape == (3 * inner,)
    assert w_out.shape == (inner, dim)
    assert b_out.shape == (dim,)

    cdt = jnp.dtype(compute_dtype)
    f32 = jnp.float32
    out_dtype = x.dtype if out_dtype is None else out_dtype

    hb = _auto_head_pack(heads, dim_head) if head_pack is None else head_pack
    assert heads % hb == 0, "head_pack must divide heads"
    num_groups = heads // hb

    # Lane/sublane-friendly tiles; pad + mask the tail instead of shrinking tiles.
    tq = max(16, (min(q_tile, _round_up(n, 16)) // 16) * 16)
    tkv = max(128, (min(kv_tile, _round_up(n, 128)) // 128) * 128)
    n_q_pad = _round_up(n, tq)
    n_kv_pad = _round_up(n, tkv)
    num_kv_chunks = n_kv_pad // tkv

    # ---- QKV projection: one full-width XLA GEMM (f32 accumulation); never
    # recomputed inside the kernel.  1/sqrt(dh) folded into the q columns. ----
    scale = 1.0 / math.sqrt(dim_head)
    w_fused = jnp.concatenate([w_qkv[:, :inner] * scale, w_qkv[:, inner:]], axis=1)
    b_fused = jnp.concatenate([b_qkv[:inner] * scale, b_qkv[inner:]])
    qkv = jnp.dot(x.reshape(b * n, dim).astype(cdt), w_fused.astype(cdt),
                  preferred_element_type=f32) + b_fused.astype(f32)
    qkv = qkv.reshape(b, n, 3, heads, dim_head)   # fused features ordered [slot, head, dh]

    # Head-major layouts; K pre-transposed to (dh, n) so the kernel needs no vxpose.
    q = qkv[:, :, 0].transpose(0, 2, 1, 3)        # (b, heads, n, dh)
    k = qkv[:, :, 1].transpose(0, 2, 1, 3)
    v = qkv[:, :, 2].transpose(0, 2, 1, 3)

    q = jnp.pad(q, ((0, 0), (0, 0), (0, n_q_pad - n), (0, 0)))
    k = jnp.pad(k, ((0, 0), (0, 0), (0, n_kv_pad - n), (0, 0)))
    v = jnp.pad(v, ((0, 0), (0, 0), (0, n_kv_pad - n), (0, 0)))

    q = q.reshape(b, num_groups, hb, n_q_pad, dim_head).astype(cdt)
    kT = k.transpose(0, 1, 3, 2).reshape(b, num_groups, hb, dim_head, n_kv_pad).astype(cdt)
    v = v.reshape(b, num_groups, hb, n_kv_pad, dim_head).astype(cdt)

    wo = w_out.astype(cdt)
    bo = b_out.reshape(1, dim).astype(f32)

    kernel = _make_attention_kernel(
        n_real=n, num_groups=num_groups, heads_per_group=hb, dim_head=dim_head,
        tkv=tkv, num_kv_chunks=num_kv_chunks, compute_dtype=cdt,
        approx_recip=(cdt != jnp.dtype(jnp.float32)))

    # Batch outermost so the resident K/V/w_out inputs are DMA'd once per batch.
    grid = (b, n_q_pad // tq)
    const_map = lambda bi, qi: (0, 0)

    # TODO(synk): for very long sequences or very large dim on v7x (64 MiB VMEM),
    # single-buffer the constant-index inputs (pipeline_mode=pl.Buffered(1)) and/or
    # move the kv axis back onto the grid.
    out = pl.pallas_call(
        kernel,
        out_shape=jax.ShapeDtypeStruct((b, n_q_pad, dim), out_dtype),
        grid_spec=pltpu.PrefetchScalarGridSpec(
            num_scalar_prefetch=0,
            grid=grid,
            in_specs=[
                pl.BlockSpec((1, num_groups, hb, tq, dim_head),
                             lambda bi, qi: (bi, 0, 0, qi, 0)),      # q tile (all heads)
                pl.BlockSpec((1, num_groups, hb, dim_head, n_kv_pad),
                             lambda bi, qi: (bi, 0, 0, 0, 0)),       # K^T, resident per batch
                pl.BlockSpec((1, num_groups, hb, n_kv_pad, dim_head),
                             lambda bi, qi: (bi, 0, 0, 0, 0)),       # V, resident per batch
                pl.BlockSpec((inner, dim), const_map),               # w_out, resident
                pl.BlockSpec((1, dim), const_map),                   # b_out
            ],
            out_specs=pl.BlockSpec((1, tq, dim), lambda bi, qi: (bi, qi, 0)),
            scratch_shapes=[
                pltpu.VMEM((hb, tq, 1), f32),            # running max
                pltpu.VMEM((hb, tq, 1), f32),            # running denom
                pltpu.VMEM((hb, tq, dim_head), f32),     # per-group attention accumulator
                pltpu.VMEM((tq, inner), f32),            # all-heads attention output slab
            ],
        ),
        compiler_params=pltpu.CompilerParams(
            dimension_semantics=("parallel", "parallel"),
            vmem_limit_bytes=vmem_limit_bytes,
        ),
    )(q, kT, v, wo, bo)
    return out[:, :n, :]


def attention_reference(x, w_qkv, b_qkv, w_out, b_out, heads, dim_head):
    b, n, dim = x.shape
    inner = heads * dim_head
    qkv = jnp.einsum("bnd,de->bne", x, w_qkv) + b_qkv          # (b, n, 3*inner)
    qkv = qkv.reshape(b, n, 3, heads, dim_head).transpose(0, 2, 3, 1, 4)
    q, k, v = qkv[:, 0], qkv[:, 1], qkv[:, 2]                  # (b, h, n, dh)
    s = jnp.einsum("bhqd,bhkd->bhqk", q, k) / math.sqrt(dim_head)
    p = jax.nn.softmax(s, axis=-1)
    o = jnp.einsum("bhqk,bhkd->bhqd", p, v)
    o = o.transpose(0, 2, 1, 3).reshape(b, n, inner)
    return jnp.einsum("bni,id->bnd", o, w_out) + b_out


if __name__ == "__main__":
    # Small shapes consistent with the module's forward.
    batch, seq, dim = 2, 8, 32
    heads, dim_head = 4, 16
    inner = heads * dim_head

    key = jax.random.PRNGKey(0)
    k1, k2, k3, k4, k5 = jax.random.split(key, 5)

    x = jax.random.normal(k1, (batch, seq, dim), dtype=jnp.float32)
    # nn.Linear parameters stored transposed: (in, out).
    w_qkv = jax.random.normal(k2, (dim, 3 * inner), dtype=jnp.float32) * 0.05
    b_qkv = jax.random.normal(k3, (3 * inner,), dtype=jnp.float32) * 0.05
    w_out = jax.random.normal(k4, (inner, dim), dtype=jnp.float32) * 0.05
    b_out = jax.random.normal(k5, (dim,), dtype=jnp.float32) * 0.05

    ref = attention_reference(x, w_qkv, b_qkv, w_out, b_out, heads, dim_head)

    # 1) f32-compute path: exact check against the reference.
    out_f32 = attention_pallas(x, w_qkv, b_qkv, w_out, b_out, heads, dim_head,
                               compute_dtype=jnp.float32)
    out_f32 = jax.block_until_ready(out_f32)
    assert out_f32.shape == (batch, seq, dim)
    assert jnp.allclose(out_f32, ref, atol=1e-4, rtol=1e-4), "f32 path mismatch vs reference"

    # 2) bf16-MXU-operand path (production config on v6e/v7x): looser tolerance.
    out_bf16 = attention_pallas(x, w_qkv, b_qkv, w_out, b_out, heads, dim_head,
                                compute_dtype=jnp.bfloat16)
    out_bf16 = jax.block_until_ready(out_bf16)
    assert out_bf16.shape == (batch, seq, dim)
    assert jnp.allclose(out_bf16, ref, atol=2e-2, rtol=2e-2), "bf16 path mismatch vs reference"

    print("KERNEL_OK")
</pallas_src>

<mosaic_0001>
module attributes {stable_mosaic.version = 11 : i64} {
  func.func @kernel(%arg0: i32, %arg1: i32, %arg2: memref<1x1x4x16x16xf32, #tpu.memory_space<vmem>>, %arg3: memref<1x1x4x16x128xf32, #tpu.memory_space<vmem>>, %arg4: memref<1x1x4x128x16xf32, #tpu.memory_space<vmem>>, %arg5: memref<64x32xf32, #tpu.memory_space<vmem>>, %arg6: memref<1x32xf32, #tpu.memory_space<vmem>>, %arg7: memref<1x16x32xf32, #tpu.memory_space<vmem>>, %arg8: memref<4x16x1xf32, #tpu.memory_space<vmem>>, %arg9: memref<4x16x1xf32, #tpu.memory_space<vmem>>, %arg10: memref<4x16x16xf32, #tpu.memory_space<vmem>>, %arg11: memref<16x64xf32, #tpu.memory_space<vmem>>) attributes {dimension_semantics = [#tpu.dimension_semantics<parallel>, #tpu.dimension_semantics<parallel>], iteration_bounds = array<i64: 2, 1>, scalar_prefetch = 0 : i64, scratch_operands = 4 : i64, tpu.core_type = #tpu.core_type<tc>, window_params = [{transform_indices = @transform_0, window_bounds = array<i64: 1, 1, 4, 16, 16>}, {transform_indices = @transform_1, window_bounds = array<i64: 1, 1, 4, 16, 128>}, {transform_indices = @transform_2, window_bounds = array<i64: 1, 1, 4, 128, 16>}, {pipeline_mode = #tpu.pipeline_mode<synchronous>, transform_indices = @transform_3, window_bounds = array<i64: 64, 32>}, {pipeline_mode = #tpu.pipeline_mode<synchronous>, transform_indices = @transform_4, window_bounds = array<i64: 1, 32>}, {transform_indices = @transform_5, window_bounds = array<i64: 1, 16, 32>}]} {
    %c0 = arith.constant 0 : index
    %c0_0 = arith.constant 0 : index
    %c0_1 = arith.constant 0 : index
    %c0_2 = arith.constant 0 : index
    %c0_3 = arith.constant 0 : index
    %0 = vector.load %arg2[%c0, %c0_0, %c0_1, %c0_2, %c0_3] : memref<1x1x4x16x16xf32, #tpu.memory_space<vmem>>, vector<1x1x4x16x16xf32>
    %1 = vector.shape_cast %0 : vector<1x1x4x16x16xf32> to vector<4x16x16xf32>
    %cst = arith.constant 0xFF800000 : f32
    %2 = vector.broadcast %cst : f32 to vector<4x16x1xf32>
    %c0_4 = arith.constant 0 : index
    %c0_5 = arith.constant 0 : index
    %c0_6 = arith.constant 0 : index
    %3 = vector.load %arg8[%c0_4, %c0_5, %c0_6] : memref<4x16x1xf32, #tpu.memory_space<vmem>>, vector<4x16x1xf32>
    tpu.vector_store %arg8[%c0_4, %c0_5, %c0_6], %2 {strides = array<i32>} : memref<4x16x1xf32, #tpu.memory_space<vmem>>, vector<4x16x1xf32>,
    %cst_7 = arith.constant 0.000000e+00 : f32
    %4 = vector.broadcast %cst_7 : f32 to vector<4x16x1xf32>
    %c0_8 = arith.constant 0 : index
    %c0_9 = arith.constant 0 : index
    %c0_10 = arith.constant 0 : index
    %5 = vector.load %arg9[%c0_8, %c0_9, %c0_10] : memref<4x16x1xf32, #tpu.memory_space<vmem>>, vector<4x16x1xf32>
    tpu.vector_store %arg9[%c0_8, %c0_9, %c0_10], %4 {strides = array<i32>} : memref<4x16x1xf32, #tpu.memory_space<vmem>>, vector<4x16x1xf32>,
    %cst_11 = arith.constant 0.000000e+00 : f32
    %6 = vector.broadcast %cst_11 : f32 to vector<4x16x16xf32>
    %c0_12 = arith.constant 0 : index
    %c0_13 = arith.constant 0 : index
    %c0_14 = arith.constant 0 : index
    %7 = vector.load %arg10[%c0_12, %c0_13, %c0_14] : memref<4x16x16xf32, #tpu.memory_space<vmem>>, vector<4x16x16xf32>
    tpu.vector_store %arg10[%c0_12, %c0_13, %c0_14], %6 {strides = array<i32>} : memref<4x16x16xf32, #tpu.memory_space<vmem>>, vector<4x16x16xf32>,
    %c0_15 = arith.constant 0 : index
    %c0_16 = arith.constant 0 : index
    %c0_17 = arith.constant 0 : index
    %c0_18 = arith.constant 0 : index
    %c0_19 = arith.constant 0 : index
    %8 = vector.load %arg3[%c0_15, %c0_16, %c0_17, %c0_18, %c0_19] : memref<1x1x4x16x128xf32, #tpu.memory_space<vmem>>, vector<1x1x4x16x128xf32>
    %9 = vector.shape_cast %8 : vector<1x1x4x16x128xf32> to vector<4x16x128xf32>
    %c0_20 = arith.constant 0 : index
    %c0_21 = arith.constant 0 : index
    %c0_22 = arith.constant 0 : index
    %c0_23 = arith.constant 0 : index
    %c0_24 = arith.constant 0 : index
    %10 = vector.load %arg4[%c0_20, %c0_21, %c0_22, %c0_23, %c0_24] : memref<1x1x4x128x16xf32, #tpu.memory_space<vmem>>, vector<1x1x4x128x16xf32>
    %11 = vector.shape_cast %10 : vector<1x1x4x128x16xf32> to vector<4x128x16xf32>
    "tpu.trace_start"() <{level = 10 : i32, message = "hqd,hdk->hqk"}> : () -> ()
    %cst_25 = arith.constant dense<0.000000e+00> : vector<4x16x128xf32>
    %12 = tpu.matmul %1, %9, %cst_25 {dimension_numbers = #tpu.dot_dimension_numbers<[2], [1], [1], [2], [0, 0, 0, 1, 1, 2], [0], [0]>} : vector<4x16x16xf32>, vector<4x16x128xf32>, vector<4x16x128xf32> -> vector<4x16x128xf32>
    "tpu.trace_stop"() : () -> ()
    %13 = tpu.iota {dimensions = array<i32: 2>} : vector<4x16x128xi32>
    %c8_i32 = arith.constant 8 : i32
    %14 = vector.broadcast %c8_i32 : i32 to vector<4x16x128xi32>
    %15 = arith.cmpi slt, %13, %14 : vector<4x16x128xi32>
    %cst_26 = arith.constant -1.000000e+30 : f32
    %16 = vector.broadcast %cst_26 : f32 to vector<4x16x128xf32>
    %17 = arith.select %15, %12, %16 : vector<4x16x128xi1>, vector<4x16x128xf32>
    %c0_27 = arith.constant 0 : index
    %c0_28 = arith.constant 0 : index
    %c0_29 = arith.constant 0 : index
    %18 = vector.load %arg8[%c0_27, %c0_28, %c0_29] : memref<4x16x1xf32, #tpu.memory_space<vmem>>, vector<4x16x1xf32>
    %cst_30 = arith.constant dense<0xFF800000> : vector<4x16xf32>
    %19 = vector.multi_reduction <maximumf>, %17, %cst_30 [2] : vector<4x16x128xf32> to vector<4x16xf32>
    %20 = vector.shape_cast %19 : vector<4x16xf32> to vector<4x16x1xf32>
    %21 = arith.maximumf %18, %20 : vector<4x16x1xf32>
    %22 = arith.subf %18, %21 : vector<4x16x1xf32>
    %23 = math.exp %22 : vector<4x16x1xf32>
    %24 = vector.broadcast %21 : vector<4x16x1xf32> to vector<4x16x128xf32>
    %25 = arith.subf %17, %24 : vector<4x16x128xf32>
    %26 = math.exp %25 : vector<4x16x128xf32>
    %c0_31 = arith.constant 0 : index
    %c0_32 = arith.constant 0 : index
    %c0_33 = arith.constant 0 : index
    %27 = vector.load %arg9[%c0_31, %c0_32, %c0_33] : memref<4x16x1xf32, #tpu.memory_space<vmem>>, vector<4x16x1xf32>
    %28 = arith.mulf %23, %27 : vector<4x16x1xf32>
    %cst_34 = arith.constant dense<0.000000e+00> : vector<4x16xf32>
    %29 = vector.multi_reduction <add>, %26, %cst_34 [2] : vector<4x16x128xf32> to vector<4x16xf32>
    %30 = vector.shape_cast %29 : vector<4x16xf32> to vector<4x16x1xf32>
    %31 = arith.addf %28, %30 : vector<4x16x1xf32>
    %c0_35 = arith.constant 0 : index
    %c0_36 = arith.constant 0 : index
    %c0_37 = arith.constant 0 : index
    %32 = vector.load %arg9[%c0_35, %c0_36, %c0_37] : memref<4x16x1xf32, #tpu.memory_space<vmem>>, vector<4x16x1xf32>
    tpu.vector_store %arg9[%c0_35, %c0_36, %c0_37], %31 {strides = array<i32>} : memref<4x16x1xf32, #tpu.memory_space<vmem>>, vector<4x16x1xf32>,
    %c0_38 = arith.constant 0 : index
    %c0_39 = arith.constant 0 : index
    %c0_40 = arith.constant 0 : index
    %33 = vector.load %arg10[%c0_38, %c0_39, %c0_40] : memref<4x16x16xf32, #tpu.memory_space<vmem>>, vector<4x16x16xf32>
    %34 = vector.broadcast %23 : vector<4x16x1xf32> to vector<4x16x16xf32>
    %35 = arith.mulf %34, %33 : vector<4x16x16xf32>
    "tpu.trace_start"() <{level = 10 : i32, message = "hqk,hkd->hqd"}> : () -> ()
    %cst_41 = arith.constant dense<0.000000e+00> : vector<4x16x16xf32>
    %36 = tpu.matmul %26, %11, %cst_41 {dimension_numbers = #tpu.dot_dimension_numbers<[2], [1], [1], [2], [0, 0, 0, 1, 1, 2], [0], [0]>} : vector<4x16x128xf32>, vector<4x128x16xf32>, vector<4x16x16xf32> -> vector<4x16x16xf32>
    "tpu.trace_stop"() : () -> ()
    %37 = arith.addf %35, %36 : vector<4x16x16xf32>
    %c0_42 = arith.constant 0 : index
    %c0_43 = arith.constant 0 : index
    %c0_44 = arith.constant 0 : index
    %38 = vector.load %arg10[%c0_42, %c0_43, %c0_44] : memref<4x16x16xf32, #tpu.memory_space<vmem>>, vector<4x16x16xf32>
    tpu.vector_store %arg10[%c0_42, %c0_43, %c0_44], %37 {strides = array<i32>} : memref<4x16x16xf32, #tpu.memory_space<vmem>>, vector<4x16x16xf32>,
    %c0_45 = arith.constant 0 : index
    %c0_46 = arith.constant 0 : index
    %c0_47 = arith.constant 0 : index
    %39 = vector.load %arg8[%c0_45, %c0_46, %c0_47] : memref<4x16x1xf32, #tpu.memory_space<vmem>>, vector<4x16x1xf32>
    tpu.vector_store %arg8[%c0_45, %c0_46, %c0_47], %21 {strides = array<i32>} : memref<4x16x1xf32, #tpu.memory_space<vmem>>, vector<4x16x1xf32>,
    %c0_48 = arith.constant 0 : index
    %c0_49 = arith.constant 0 : index
    %c0_50 = arith.constant 0 : index
    %40 = vector.load %arg10[%c0_48, %c0_49, %c0_50] : memref<4x16x16xf32, #tpu.memory_space<vmem>>, vector<4x16x16xf32>
    %c0_51 = arith.constant 0 : index
    %c0_52 = arith.constant 0 : index
    %c0_53 = arith.constant 0 : index
    %41 = vector.load %arg9[%c0_51, %c0_52, %c0_53] : memref<4x16x1xf32, #tpu.memory_space<vmem>>, vector<4x16x1xf32>
    %42 = tpu.reciprocal %41 : vector<4x16x1xf32> -> vector<4x16x1xf32>
    %43 = vector.broadcast %42 : vector<4x16x1xf32> to vector<4x16x16xf32>
    %44 = arith.mulf %40, %43 : vector<4x16x16xf32>
    %45 = vector.extract_strided_slice %44 {offsets = [0, 0, 0], sizes = [1, 16, 16], strides = [1, 1, 1]} : vector<4x16x16xf32> to vector<1x16x16xf32>
    %46 = vector.shape_cast %45 : vector<1x16x16xf32> to vector<16x16xf32>
    %c0_54 = arith.constant 0 : index
    %c0_55 = arith.constant 0 : index
    %47 = vector.load %arg11[%c0_54, %c0_55] : memref<16x64xf32, #tpu.memory_space<vmem>>, vector<16x16xf32>
    tpu.vector_store %arg11[%c0_54, %c0_55], %46 {strides = array<i32>} : memref<16x64xf32, #tpu.memory_space<vmem>>, vector<16x16xf32>,
    %48 = vector.extract_strided_slice %44 {offsets = [1, 0, 0], sizes = [1, 16, 16], strides = [1, 1, 1]} : vector<4x16x16xf32> to vector<1x16x16xf32>
    %49 = vector.shape_cast %48 : vector<1x16x16xf32> to vector<16x16xf32>
    %c0_56 = arith.constant 0 : index
    %c16 = arith.constant 16 : index
    %50 = vector.load %arg11[%c0_56, %c16] : memref<16x64xf32, #tpu.memory_space<vmem>>, vector<16x16xf32>
    tpu.vector_store %arg11[%c0_56, %c16], %49 {strides = array<i32>} : memref<16x64xf32, #tpu.memory_space<vmem>>, vector<16x16xf32>,
    %51 = vector.extract_strided_slice %44 {offsets = [2, 0, 0], sizes = [1, 16, 16], strides = [1, 1, 1]} : vector<4x16x16xf32> to vector<1x16x16xf32>
    %52 = vector.shape_cast %51 : vector<1x16x16xf32> to vector<16x16xf32>
    %c0_57 = arith.constant 0 : index
    %c32 = arith.constant 32 : index
    %53 = vector.load %arg11[%c0_57, %c32] : memref<16x64xf32, #tpu.memory_space<vmem>>, vector<16x16xf32>
    tpu.vector_store %arg11[%c0_57, %c32], %52 {strides = array<i32>} : memref<16x64xf32, #tpu.memory_space<vmem>>, vector<16x16xf32>,
    %54 = vector.extract_strided_slice %44 {offsets = [3, 0, 0], sizes = [1, 16, 16], strides = [1, 1, 1]} : vector<4x16x16xf32> to vector<1x16x16xf32>
    %55 = vector.shape_cast %54 : vector<1x16x16xf32> to vector<16x16xf32>
    %c0_58 = arith.constant 0 : index
    %c48 = arith.constant 48 : index
    %56 = vector.load %arg11[%c0_58, %c48] : memref<16x64xf32, #tpu.memory_space<vmem>>, vector<16x16xf32>
    tpu.vector_store %arg11[%c0_58, %c48], %55 {strides = array<i32>} : memref<16x64xf32, #tpu.memory_space<vmem>>, vector<16x16xf32>,
    %c0_59 = arith.constant 0 : index
    %c0_60 = arith.constant 0 : index
    %57 = vector.load %arg11[%c0_59, %c0_60] : memref<16x64xf32, #tpu.memory_space<vmem>>, vector<16x64xf32>
    %c0_61 = arith.constant 0 : index
    %c0_62 = arith.constant 0 : index
    %58 = vector.load %arg5[%c0_61, %c0_62] : memref<64x32xf32, #tpu.memory_space<vmem>>, vector<64x32xf32>
    %cst_63 = arith.constant dense<0.000000e+00> : vector<16x32xf32>
    %59 = tpu.matmul %57, %58, %cst_63 {dimension_numbers = #tpu.dot_dimension_numbers<[1], [0], [0], [1], [0, 0, 1, 1], [], []>} : vector<16x64xf32>, vector<64x32xf32>, vector<16x32xf32> -> vector<16x32xf32>
    %c0_64 = arith.constant 0 : index
    %c0_65 = arith.constant 0 : index
    %60 = vector.load %arg6[%c0_64, %c0_65] : memref<1x32xf32, #tpu.memory_space<vmem>>, vector<1x32xf32>
    %61 = vector.broadcast %60 : vector<1x32xf32> to vector<16x32xf32>
    %62 = arith.addf %59, %61 : vector<16x32xf32>
    %c0_66 = arith.constant 0 : index
    %c0_67 = arith.constant 0 : index
    %c0_68 = arith.constant 0 : index
    %63 = vector.load %arg7[%c0_66, %c0_67, %c0_68] : memref<1x16x32xf32, #tpu.memory_space<vmem>>, vector<1x16x32xf32>
    %64 = vector.shape_cast %63 : vector<1x16x32xf32> to vector<16x32xf32>
    %65 = vector.shape_cast %62 : vector<16x32xf32> to vector<1x16x32xf32>
    tpu.vector_store %arg7[%c0_66, %c0_67, %c0_68], %65 {strides = array<i32>} : memref<1x16x32xf32, #tpu.memory_space<vmem>>, vector<1x16x32xf32>,
    return
  }
  func.func @transform_0(%arg0: i32, %arg1: i32) -> (i32, i32, i32, i32, i32) {
    %c0_i32 = arith.constant 0 : i32
    %c0_i32_0 = arith.constant 0 : i32
    %c0_i32_1 = arith.constant 0 : i32
    %c0_i32_2 = arith.constant 0 : i32
    return %arg0, %c0_i32, %c0_i32_0, %arg1, %c0_i32_1 : i32, i32, i32, i32, i32
  }
  func.func @transform_1(%arg0: i32, %arg1: i32) -> (i32, i32, i32, i32, i32) {
    %c0_i32 = arith.constant 0 : i32
    %c0_i32_0 = arith.constant 0 : i32
    %c0_i32_1 = arith.constant 0 : i32
    %c0_i32_2 = arith.constant 0 : i32
    %c0_i32_3 = arith.constant 0 : i32
    return %arg0, %c0_i32, %c0_i32_0, %c0_i32_1, %c0_i32_2 : i32, i32, i32, i32, i32
  }
  func.func @transform_2(%arg0: i32, %arg1: i32) -> (i32, i32, i32, i32, i32) {
    %c0_i32 = arith.constant 0 : i32
    %c0_i32_0 = arith.constant 0 : i32
    %c0_i32_1 = arith.constant 0 : i32
    %c0_i32_2 = arith.constant 0 : i32
    %c0_i32_3 = arith.constant 0 : i32
    return %arg0, %c0_i32, %c0_i32_0, %c0_i32_1, %c0_i32_2 : i32, i32, i32, i32, i32
  }
  func.func @transform_3(%arg0: i32, %arg1: i32) -> (i32, i32) {
    %c0_i32 = arith.constant 0 : i32
    %c0_i32_0 = arith.constant 0 : i32
    %c0_i32_1 = arith.constant 0 : i32
    return %c0_i32, %c0_i32_0 : i32, i32
  }
  func.func @transform_4(%arg0: i32, %arg1: i32) -> (i32, i32) {
    %c0_i32 = arith.constant 0 : i32
    %c0_i32_0 = arith.constant 0 : i32
    %c0_i32_1 = arith.constant 0 : i32
    return %c0_i32, %c0_i32_0 : i32, i32
  }
  func.func @transform_5(%arg0: i32, %arg1: i32) -> (i32, i32, i32) {
    %c0_i32 = arith.constant 0 : i32
    %c0_i32_0 = arith.constant 0 : i32
    return %arg0, %arg1, %c0_i32 : i32, i32, i32
  }
}

</mosaic_0001>

<llo_original>
// kernel: tpu_custom_call.1
$region0: #{tpu_custom_call.1}
  #allocation0 [shape = 'u32[]', space=smem, size = 0x4, offset = 0x4, fixed_abs, tag = 'smem constant byte address 0x4 - core index']
  #allocation1 [shape = 'u32[144,128]{1,0:T(1,128)}', space=vmem, size = 0x12000, scoped, tag = 'internal scratch']
  #allocation2 [shape = 'f32[4,16,1]{2,1,0:T(8,128)}', space=vmem, size = 0x8000, scoped, tag = 'scratch operand']
  #allocation3 [shape = 'f32[4,16,1]{2,1,0:T(8,128)}', space=vmem, size = 0x8000, scoped, tag = 'scratch operand']
  #allocation4 [shape = 'f32[4,16,16]{2,1,0:T(8,128)}', space=vmem, size = 0x8000, scoped, tag = 'scratch operand']
  #allocation5 [shape = 'f32[16,64]{1,0:T(8,128)}', space=vmem, size = 0x2000, scoped, tag = 'scratch operand']
  %s0 = inlined_call_operand.hbm [shape: f32[2,1,4,16,16], index: 0, kind: input, shape index: {}]
  %s1 = inlined_call_operand.hbm [shape: f32[2,1,4,16,128], index: 1, kind: input, shape index: {}]
  %s2 = inlined_call_operand.hbm [shape: f32[2,1,4,128,16], index: 2, kind: input, shape index: {}]
  %s3 = inlined_call_operand.hbm [shape: f32[64,32], index: 3, kind: input, shape index: {}]
  %s4 = inlined_call_operand.hbm [shape: f32[1,32], index: 4, kind: input, shape index: {}]
  %s5 = inlined_call_operand.hbm [shape: f32[2,16,32], index: 5, kind: output, shape index: {}]
  %s6 = sld [smem:[#allocation0]]
  $region73: #{tpu_custom_call.1} parent=0
    _
  %s8 = ssub.s32 1, %s6
  %s9 = scalar_select 0, %s8, %s6
  $region1: #{tpu_custom_call.1} parent=0
    #allocation6 [shape = 'u8[65536]{0}', space=vmem, size = 0x10000, scoped, tag = 'input window, operand 0']
    #allocation7 [shape = 's32[2]{0}', space=sflag, size = 0x8, scoped, tag = 'scoped memory for tpu_custom_call.1']
    #allocation8 [shape = 's32[2]{0}', space=sflag, size = 0x8, scoped, tag = 'scoped memory for tpu_custom_call.1']
    #allocation9 [shape = 'u8[65536]{0}', space=vmem, size = 0x10000, scoped, tag = 'input window, operand 1']
    #allocation10 [shape = 's32[2]{0}', space=sflag, size = 0x8, scoped, tag = 'scoped memory for tpu_custom_call.1']
    #allocation11 [shape = 'u8[524288]{0}', space=vmem, size = 0x80000, scoped, tag = 'input window, operand 2']
    #allocation12 [shape = 'u8[32768]{0}', space=vmem, size = 0x8000, scoped, tag = 'input window, operand 3, single buffered']
    #allocation13 [shape = 's32[1]{0}', space=sflag, size = 0x4, scoped, tag = 'scoped memory for tpu_custom_call.1']
    #allocation14 [shape = 'u8[512]{0}', space=vmem, size = 0x400, scoped, tag = 'input window, operand 4, single buffered']
    #allocation15 [shape = 'u8[16384]{0}', space=vmem, size = 0x4000, scoped, tag = 'output window, operand 0']
    %10 = vsyncpa [#allocation7], 0
    %s11 = scalar_lea.sflag [#allocation7], 1
    %12 = vsyncpa %s11, 0
    %13 = vsyncpa [#allocation10], 0
    %s14 = scalar_lea.sflag [#allocation10], 1
    %15 = vsyncpa %s14, 0
    %16 = vsyncpa [#allocation13], 0
    %17 = vsyncpa [#allocation8], 0
    %s18 = scalar_lea.sflag [#allocation8], 1
    %19 = vsyncpa %s18, 0
    loop: start=0, step=1, limit=4
    $region2: #{tpu_custom_call.1} parent=1 // loop_pre_header
      _
    $region3: #{tpu_custom_call.1} parent=1 // loop_header
      %s21 = sphi 0, %s25
      %p22 = scmp.ge.s32.totalorder %s21, 4
      %s28 = sphi 0, %s40
      %s29 = sphi 0, %s36
      %s30 = sphi 0, %s28
      %s31 = sphi 0, %s29
      %s32 = sphi 0, %s30
      %s33 = sphi 0, %s31
      %s45 = sphi 0, %s47
      %s48 = sphi 0, %s45
      %s49 = sphi 0, %s48
      %s65 = sphi 0, %s49
      %s71 = sphi 0, %s73
      %s74 = sphi 0, %s71
      %s75 = sphi 0, %s74
      %s91 = sphi 0, %s75
      %s97 = sphi 0, %s99
      %s100 = sphi 0, %s97
      %s101 = sphi 0, %s100
      %s117 = sphi 0, %s101
      %s121 = sphi 0, %s121
      %s123 = sphi 0, %s121
      %s124 = sphi 0, %s123
      %s138 = sphi 0, %s124
      %s142 = sphi 0, %s142
      %s144 = sphi 0, %s142
      %s145 = sphi 0, %s144
      %s159 = sphi 0, %s145
      %s167 = sphi 0, %s169
      %s170 = sphi 0, %s167
      %s171 = sphi 0, %s170
      %s187 = sphi 0, %s171
    $region4: #{tpu_custom_call.1} parent=1 // loop_header_branch
      %24 = sbr.rel (%p22) target = $region8
    $region5: #{tpu_custom_call.1} parent=1 // loop_body
      %s26 = ssub.s32 %s21, 1
      %s27 = ssub.s32 %s21, 2
      %s34 = sadd.s32 1, %s29
      %p35 = scmp.ge.s32.totalorder %s34, 1
      %s36 = scalar_select %p35, 0, %s34
      %s37 = sadd.s32 1, %s28
      %s38 = scalar_select %p35, %s37, %s28
      %p39 = scmp.ge.s32.totalorder %s38, 2
      %s40 = scalar_select %p39, 0, %s38
      %s41 = ssub.s32 %s28, %s40
      %s42 = ssub.s32 %s29, %s36
      %s43 = sor.u32 %s41, %s42
      %p44 = scmp.eq.s32.totalorder %s43, 0
      %s46 = sadd.s32 %s45, 1
      %s47 = scalar_select %p44, %s45, %s46
      %p50 = pneg %p44
      %p51 = scmp.eq.s32.totalorder %s21, 1
      %p52 = por %p50, %p51
      %p53 = scmp.ne.s32.totalorder %s45, %s48
      %p54 = scmp.eq.s32.totalorder %s21, 0
      %p55 = por %p53, %p54
      %p56 = scmp.ne.s32.totalorder %s45, %s48
      %p57 = scmp.eq.s32.totalorder %s26, 1
      %p58 = por %p56, %p57
      %p59 = scmp.ne.s32.totalorder %s48, %s49
      %p60 = scmp.eq.s32.totalorder %s26, 0
      %p61 = por %p59, %p60
      %p62 = scmp.ne.s32.totalorder %s48, %s49
      %p63 = scmp.eq.s32.totalorder %s27, 1
      %p64 = por %p62, %p63
      %p66 = scmp.ne.s32.totalorder %s49, %s65
      %p67 = scmp.eq.s32.totalorder %s27, 0
      %p68 = por %p66, %p67
      %s69 = ssub.s32 %s28, %s40
      %p70 = scmp.eq.s32.totalorder %s69, 0
      %s72 = sadd.s32 %s71, 1
      %s73 = scalar_select %p70, %s71, %s72
      %p76 = pneg %p70
      %p77 = scmp.eq.s32.totalorder %s21, 1
      %p78 = por %p76, %p77
      %p79 = scmp.ne.s32.totalorder %s71, %s74
      %p80 = scmp.eq.s32.totalorder %s21, 0
      %p81 = por %p79, %p80
      %p82 = scmp.ne.s32.totalorder %s71, %s74
      %p83 = scmp.eq.s32.totalorder %s26, 1
      %p84 = por %p82, %p83
      %p85 = scmp.ne.s32.totalorder %s74, %s75
      %p86 = scmp.eq.s32.totalorder %s26, 0
      %p87 = por %p85, %p86
      %p88 = scmp.ne.s32.totalorder %s74, %s75
      %p89 = scmp.eq.s32.totalorder %s27, 1
      %p90 = por %p88, %p89
      %p92 = scmp.ne.s32.totalorder %s75, %s91
      %p93 = scmp.eq.s32.totalorder %s27, 0
      %p94 = por %p92, %p93
      %s95 = ssub.s32 %s28, %s40
      %p96 = scmp.eq.s32.totalorder %s95, 0
      %s98 = sadd.s32 %s97, 1
      %s99 = scalar_select %p96, %s97, %s98
      %p102 = pneg %p96
      %p103 = scmp.eq.s32.totalorder %s21, 1
      %p104 = por %p102, %p103
      %p105 = scmp.ne.s32.totalorder %s97, %s100
      %p106 = scmp.eq.s32.totalorder %s21, 0
      %p107 = por %p105, %p106
      %p108 = scmp.ne.s32.totalorder %s97, %s100
      %p109 = scmp.eq.s32.totalorder %s26, 1
      %p110 = por %p108, %p109
      %p111 = scmp.ne.s32.totalorder %s100, %s101
      %p112 = scmp.eq.s32.totalorder %s26, 0
      %p113 = por %p111, %p112
      %p114 = scmp.ne.s32.totalorder %s100, %s101
      %p115 = scmp.eq.s32.totalorder %s27, 1
      %p116 = por %p114, %p115
      %p118 = scmp.ne.s32.totalorder %s101, %s117
      %p119 = scmp.eq.s32.totalorder %s27, 0
      %p120 = por %p118, %p119
      %s122 = sadd.s32 %s121, 1
      %p125 = scmp.eq.s32.totalorder %s21, 1
      %p126 = scmp.ne.s32.totalorder %s121, %s123
      %p127 = scmp.eq.s32.totalorder %s21, 0
      %p128 = por %p126, %p127
      %p129 = scmp.ne.s32.totalorder %s121, %s123
      %p130 = scmp.eq.s32.totalorder %s26, 1
      %p131 = por %p129, %p130
      %p132 = scmp.ne.s32.totalorder %s123, %s124
      %p133 = scmp.eq.s32.totalorder %s26, 0
      %p134 = por %p132, %p133
      %p135 = scmp.ne.s32.totalorder %s123, %s124
      %p136 = scmp.eq.s32.totalorder %s27, 1
      %p137 = por %p135, %p136
      %p139 = scmp.ne.s32.totalorder %s124, %s138
      %p140 = scmp.eq.s32.totalorder %s27, 0
      %p141 = por %p139, %p140
      %s143 = sadd.s32 %s142, 1
      %p146 = scmp.eq.s32.totalorder %s21, 1
      %p147 = scmp.ne.s32.totalorder %s142, %s144
      %p148 = scmp.eq.s32.totalorder %s21, 0
      %p149 = por %p147, %p148
      %p150 = scmp.ne.s32.totalorder %s142, %s144
      %p151 = scmp.eq.s32.totalorder %s26, 1
      %p152 = por %p150, %p151
      %p153 = scmp.ne.s32.totalorder %s144, %s145
      %p154 = scmp.eq.s32.totalorder %s26, 0
      %p155 = por %p153, %p154
      %p156 = scmp.ne.s32.totalorder %s144, %s145
      %p157 = scmp.eq.s32.totalorder %s27, 1
      %p158 = por %p156, %p157
      %p160 = scmp.ne.s32.totalorder %s145, %s159
      %p161 = scmp.eq.s32.totalorder %s27, 0
      %p162 = por %p160, %p161
      %s163 = ssub.s32 %s28, %s40
      %s164 = ssub.s32 %s29, %s36
      %s165 = sor.u32 %s163, %s164
      %p166 = scmp.eq.s32.totalorder %s165, 0
      %s168 = sadd.s32 %s167, 1
      %s169 = scalar_select %p166, %s167, %s168
      %p172 = pneg %p166
      %p173 = scmp.eq.s32.totalorder %s21, 1
      %p174 = por %p172, %p173
      %p175 = scmp.ne.s32.totalorder %s167, %s170
      %p176 = scmp.eq.s32.totalorder %s21, 0
      %p177 = por %p175, %p176
      %p178 = scmp.ne.s32.totalorder %s167, %s170
      %p179 = scmp.eq.s32.totalorder %s26, 1
      %p180 = por %p178, %p179
      %p181 = scmp.ne.s32.totalorder %s170, %s171
      %p182 = scmp.eq.s32.totalorder %s26, 0
      %p183 = por %p181, %p182
      %p184 = scmp.ne.s32.totalorder %s170, %s171
      %p185 = scmp.eq.s32.totalorder %s27, 1
      %p186 = por %p184, %p185
      %p188 = scmp.ne.s32.totalorder %s171, %s187
      %p189 = scmp.eq.s32.totalorder %s27, 0
      %p190 = por %p188, %p189
      %p191 = scmp.le.s32.totalorder 1, %s21
      %p192 = scmp.lt.s32.totalorder %s21, 3
      %p193 = pnand %p191, %p192
      %p194 = pneg %p193
      // Predicated region
      $region9: #{tpu_custom_call.1} parent=5 // pred_check
        _
      $region10: #{tpu_custom_call.1} parent=5 // pred_check_branch
        %196 = sbr.rel (%p193) target = $region12
      $region11: #{tpu_custom_call.1} parent=5 // pred_region
        %s197 = ssub.s32 %s21, 1
        // Predicated region
        $region13: #{tpu_custom_call.1} parent=11 // pred_check
          %p198 = pneg %p134
        $region14: #{tpu_custom_call.1} parent=11 // pred_check_branch
          %200 = sbr.rel (%p198) target = $region16
        $region15: #{tpu_custom_call.1} parent=11 // pred_region
          %s202 = ssub.s32 1024, 1024
          %203 = vsyncadd [#allocation13], %s202
          %s204 = sshll.u32 [#allocation12], 4
          %s205 = int_to_ptr.vmem [resolvable:$true] %s204
          %210 = dma.hbm_to_vmem [thread:$0]  %s3, 1024, %s205, [#allocation13], 128, 128, 8
        $region16: #{tpu_custom_call.1} parent=11 // pred_fallthru
          _
        // Predicated region
        $region17: #{tpu_custom_call.1} parent=11 // pred_check
          %p211 = pneg %p155
        $region18: #{tpu_custom_call.1} parent=11 // pred_check_branch
          %213 = sbr.rel (%p211) target = $region20
        $region19: #{tpu_custom_call.1} parent=11 // pred_region
          %s215 = ssub.s32 16, 16
          %216 = vsyncadd [#allocation13], %s215
          %s218 = sshll.u32 [#allocation14], 4
          %s219 = int_to_ptr.vmem [resolvable:$true] %s218
          %221 = dma.hbm_to_vmem [thread:$0]  %s4, 16, %s219, [#allocation13]
        $region20: #{tpu_custom_call.1} parent=11 // pred_fallthru
          _
      $region12: #{tpu_custom_call.1} parent=5 // pred_fallthru
        _
      %p222 = scmp.lt.s32.totalorder %s21, 2
      // Predicated region
      $region21: #{tpu_custom_call.1} parent=5 // pred_check
        %p223 = pneg %p222
      $region22: #{tpu_custom_call.1} parent=5 // pred_check_branch
        %225 = sbr.rel (%p223) target = $region24
      $region23: #{tpu_custom_call.1} parent=5 // pred_region
        // Predicated region
        $region25: #{tpu_custom_call.1} parent=23 // pred_check
          %p226 = pneg %p55
        $region26: #{tpu_custom_call.1} parent=23 // pred_check_branch
          %228 = sbr.rel (%p226) target = $region28
        $region27: #{tpu_custom_call.1} parent=23 // pred_region
          %s229 = sand.u32 %s45, 1
          %s230 = scalar_lea.sflag [#allocation7], %s229
          %s231 = sand.u32 %s45, 1
          %s232 = smul.addr %s231, 64
          %s233 = scalar_lea.vmem [#allocation6], %s232
          %s234 = smul.u32 2, %s29
          %s236 = ssub.s32 1024, 1024
          %237 = vsyncadd %s230, %s236
          %s238 = smul.addr %s28, 8
          %s239 = sadd.s32 %s234, %s238
          %s240 = smul.addr %s239, 128
          %s241 = scalar_lea.hbm %s0, %s240
          %s242 = sshll.u32 %s233, 4
          %s243 = int_to_ptr.vmem [resolvable:$true] %s242
          %248 = dma.hbm_to_vmem [thread:$0]  %s241, 1024, %s243, %s230, 128, 128, 8
        $region28: #{tpu_custom_call.1} parent=23 // pred_fallthru
          _
        // Predicated region
        $region29: #{tpu_custom_call.1} parent=23 // pred_check
          %p249 = pneg %p81
        $region30: #{tpu_custom_call.1} parent=23 // pred_check_branch
          %251 = sbr.rel (%p249) target = $region32
        $region31: #{tpu_custom_call.1} parent=23 // pred_region
          %s252 = sand.u32 %s21, 1
          %s253 = scalar_lea.sflag [#allocation10], %s252
          %s254 = sand.u32 %s71, 1
          %s255 = smul.addr %s254, 64
          %s256 = scalar_lea.vmem [#allocation9], %s255
          %s258 = ssub.s32 1024, 1024
          %259 = vsyncadd %s253, %s258
          %s260 = smul.addr %s28, 8
          %s261 = smul.addr %s260, 128
          %s262 = scalar_lea.hbm %s1, %s261
          %s263 = sshll.u32 %s256, 4
          %s264 = int_to_ptr.vmem [resolvable:$true] %s263
          %269 = dma.hbm_to_vmem [thread:$0]  %s262, 1024, %s264, %s253, 128, 128, 8
        $region32: #{tpu_custom_call.1} parent=23 // pred_fallthru
          _
        // Predicated region
        $region33: #{tpu_custom_call.1} parent=23 // pred_check
          %p270 = pneg %p107
        $region34: #{tpu_custom_call.1} parent=23 // pred_check_branch
          %272 = sbr.rel (%p270) target = $region36
        $region35: #{tpu_custom_call.1} parent=23 // pred_region
          %s273 = sand.u32 %s21, 1
          %s274 = scalar_lea.sflag [#allocation10], %s273
          %s275 = sand.u32 %s97, 1
          %s276 = smul.addr %s275, 512
          %s277 = scalar_lea.vmem [#allocation11], %s276
          %s279 = ssub.s32 8192, 8192
          %280 = vsyncadd %s274, %s279
          %s281 = smul.addr %s28, 64
          %s282 = smul.addr %s281, 128
          %s283 = scalar_lea.hbm %s2, %s282
          %s284 = sshll.u32 %s277, 4
          %s285 = int_to_ptr.vmem [resolvable:$true] %s284
          %290 = dma.hbm_to_vmem [thread:$0]  %s283, 8192, %s285, %s274, 128, 128, 8
        $region36: #{tpu_custom_call.1} parent=23 // pred_fallthru
          _
      $region24: #{tpu_custom_call.1} parent=5 // pred_fallthru
        _
      %p291 = scmp.le.s32.totalorder 1, %s21
      %p292 = scmp.lt.s32.totalorder %s21, 3
      %p293 = pnand %p291, %p292
      %p294 = pneg %p293
      // Predicated region
      $region37: #{tpu_custom_call.1} parent=5 // pred_check
        _
      $region38: #{tpu_custom_call.1} parent=5 // pred_check_branch
        %296 = sbr.rel (%p293) target = $region40
      $region39: #{tpu_custom_call.1} parent=5 // pred_region
        %s297 = ssub.s32 %s21, 1
        %s298 = sand.u32 %s48, 1
        %s299 = scalar_lea.sflag [#allocation7], %s298
        %s300 = sand.u32 %s48, 1
        %s301 = smul.addr %s300, 64
        %s302 = scalar_lea.vmem [#allocation6], %s301
        // Predicated region
        $region41: #{tpu_custom_call.1} parent=39 // pred_check
          %p303 = pneg %p61
        $region42: #{tpu_custom_call.1} parent=39 // pred_check_branch
          %305 = sbr.rel (%p303) target = $region44
        $region43: #{tpu_custom_call.1} parent=39 // pred_region
          %306 = dma.done %s299, 1024
        $region44: #{tpu_custom_call.1} parent=39 // pred_fallthru
          _
        %s307 = sand.u32 %s26, 1
        %s308 = scalar_lea.sflag [#allocation10], %s307
        %s309 = sand.u32 %s74, 1
        %s310 = smul.addr %s309, 64
        %s311 = scalar_lea.vmem [#allocation9], %s310
        // Predicated region
        $region45: #{tpu_custom_call.1} parent=39 // pred_check
          %p312 = pneg %p87
        $region46: #{tpu_custom_call.1} parent=39 // pred_check_branch
          %314 = sbr.rel (%p312) target = $region48
        $region47: #{tpu_custom_call.1} parent=39 // pred_region
          %315 = dma.done %s308, 1024
        $region48: #{tpu_custom_call.1} parent=39 // pred_fallthru
          _
        %s316 = sand.u32 %s26, 1
        %s317 = scalar_lea.sflag [#allocation10], %s316
        %s318 = sand.u32 %s100, 1
        %s319 = smul.addr %s318, 512
        %s320 = scalar_lea.vmem [#allocation11], %s319
        // Predicated region
        $region49: #{tpu_custom_call.1} parent=39 // pred_check
          %p321 = pneg %p113
        $region50: #{tpu_custom_call.1} parent=39 // pred_check_branch
          %323 = sbr.rel (%p321) target = $region52
        $region51: #{tpu_custom_call.1} parent=39 // pred_region
          %324 = dma.done %s317, 8192
        $region52: #{tpu_custom_call.1} parent=39 // pred_fallthru
          _
        // Predicated region
        $region53: #{tpu_custom_call.1} parent=39 // pred_check
          %p325 = pneg %p134
        $region54: #{tpu_custom_call.1} parent=39 // pred_check_branch
          %327 = sbr.rel (%p325) target = $region56
        $region55: #{tpu_custom_call.1} parent=39 // pred_region
          %328 = dma.done [#allocation13], 1024
        $region56: #{tpu_custom_call.1} parent=39 // pred_fallthru
          _
        // Predicated region
        $region57: #{tpu_custom_call.1} parent=39 // pred_check
          %p329 = pneg %p155
        $region58: #{tpu_custom_call.1} parent=39 // pred_check_branch
          %331 = sbr.rel (%p329) target = $region60
        $region59: #{tpu_custom_call.1} parent=39 // pred_region
          %332 = dma.done [#allocation13], 16
        $region60: #{tpu_custom_call.1} parent=39 // pred_fallthru
          _
        %s333 = sand.u32 %s48, 1
        %s334 = scalar_lea.sflag [#allocation7], %s333
        %s335 = sand.u32 %s48, 1
        %s336 = smul.addr %s335, 64
        %s337 = scalar_lea.vmem [#allocation6], %s336
        %p338 = pneg %p61
        %p339 = pneg %p58
        %s340 = sand.u32 %s26, 1
        %s341 = scalar_lea.sflag [#allocation10], %s340
        %s342 = sand.u32 %s74, 1
        %s343 = smul.addr %s342, 64
        %s344 = scalar_lea.vmem [#allocation9], %s343
        %p345 = pneg %p87
        %p346 = pneg %p84
        %s347 = sand.u32 %s26, 1
        %s348 = scalar_lea.sflag [#allocation10], %s347
        %s349 = sand.u32 %s100, 1
        %s350 = smul.addr %s349, 512
        %s351 = scalar_lea.vmem [#allocation11], %s350
        %p352 = pneg %p113
        %p353 = pneg %p110
        %p354 = pneg %p134
        %p355 = pneg %p131
        %p356 = pneg %p155
        %p357 = pneg %p152
        %p358 = pneg %p183
        %p359 = pneg %p180
        %s360 = sand.u32 %s170, 1
        %s361 = scalar_lea.sflag [#allocation8], %s360
        %s362 = sand.u32 %s170, 1
        %s363 = smul.addr %s362, 16
        %s364 = scalar_lea.vmem [#allocation15], %s363
        %s365 = smul.u32 2, %s31
        %s366 = smul.u32 2, %s31
        %v367 = vld [vmem:[%s302] sm:$0xff]
        %v368 = vld [vmem:[%s302 + $0x8] sm:$0xff]
        %v369 = vld [vmem:[%s302 + $0x10] sm:$0xff]
        %v370 = vld [vmem:[%s302 + $0x18] sm:$0xff]
        %v371 = vld [vmem:[%s302 + $0x20] sm:$0xff]
        %v372 = vld [vmem:[%s302 + $0x28] sm:$0xff]
        %v373 = vld [vmem:[%s302 + $0x30] sm:$0xff]
        %v374 = vld [vmem:[%s302 + $0x38] sm:$0xff]
        %vm375 = vcmask 7168
        %376 = vst.msk [vmem:[#allocation2] sm:$0xff] %vm375, -inf
        %377 = vst.msk [vmem:[#allocation2 + $0x8] sm:$0xff] %vm375, -inf
        %378 = vst.msk [vmem:[#allocation2 + $0x10] sm:$0xff] %vm375, -inf
        %379 = vst.msk [vmem:[#allocation2 + $0x18] sm:$0xff] %vm375, -inf
        %380 = vst.msk [vmem:[#allocation2 + $0x20] sm:$0xff] %vm375, -inf
        %381 = vst.msk [vmem:[#allocation2 + $0x28] sm:$0xff] %vm375, -inf
        %382 = vst.msk [vmem:[#allocation2 + $0x30] sm:$0xff] %vm375, -inf
        %383 = vst.msk [vmem:[#allocation2 + $0x38] sm:$0xff] %vm375, -inf
        %384 = vst.msk [vmem:[#allocation3] sm:$0xff] %vm375, 0.0
        %385 = vst.msk [vmem:[#allocation3 + $0x8] sm:$0xff] %vm375, 0.0
        %386 = vst.msk [vmem:[#allocation3 + $0x10] sm:$0xff] %vm375, 0.0
        %387 = vst.msk [vmem:[#allocation3 + $0x18] sm:$0xff] %vm375, 0.0
        %388 = vst.msk [vmem:[#allocation3 + $0x20] sm:$0xff] %vm375, 0.0
        %389 = vst.msk [vmem:[#allocation3 + $0x28] sm:$0xff] %vm375, 0.0
        %390 = vst.msk [vmem:[#allocation3 + $0x30] sm:$0xff] %vm375, 0.0
        %391 = vst.msk [vmem:[#allocation3 + $0x38] sm:$0xff] %vm375, 0.0
        %vm392 = vcmask 130048
        %393 = vst.msk [vmem:[#allocation4] sm:$0xff] %vm392, 0.0
        %394 = vst.msk [vmem:[#allocation4 + $0x8] sm:$0xff] %vm392, 0.0
        %395 = vst.msk [vmem:[#allocation4 + $0x10] sm:$0xff] %vm392, 0.0
        %396 = vst.msk [vmem:[#allocation4 + $0x18] sm:$0xff] %vm392, 0.0
        %397 = vst.msk [vmem:[#allocation4 + $0x20] sm:$0xff] %vm392, 0.0
        %398 = vst.msk [vmem:[#allocation4 + $0x28] sm:$0xff] %vm392, 0.0
        %399 = vst.msk [vmem:[#allocation4 + $0x30] sm:$0xff] %vm392, 0.0
        %400 = vst.msk [vmem:[#allocation4 + $0x38] sm:$0xff] %vm392, 0.0
        %v401 = vld [vmem:[%s311] sm:$0xff]
        %v402 = vld [vmem:[%s311 + $0x8] sm:$0xff]
        %v403 = vld [vmem:[%s311 + $0x10] sm:$0xff]
        %v404 = vld [vmem:[%s311 + $0x18] sm:$0xff]
        %v405 = vld [vmem:[%s311 + $0x20] sm:$0xff]
        %v406 = vld [vmem:[%s311 + $0x28] sm:$0xff]
        %v407 = vld [vmem:[%s311 + $0x30] sm:$0xff]
        %v408 = vld [vmem:[%s311 + $0x38] sm:$0xff]
        %v409 = vld [vmem:[%s320] sm:$0xff]
        %v410 = vld [vmem:[%s320 + $0x8] sm:$0xff]
        %v411 = vld [vmem:[%s320 + $0x10] sm:$0xff]
        %v412 = vld [vmem:[%s320 + $0x18] sm:$0xff]
        %v413 = vld [vmem:[%s320 + $0x20] sm:$0xff]
        %v414 = vld [vmem:[%s320 + $0x28] sm:$0xff]
        %v415 = vld [vmem:[%s320 + $0x30] sm:$0xff]
        %v416 = vld [vmem:[%s320 + $0x38] sm:$0xff]
        %v417 = vld [vmem:[%s320 + $0x40] sm:$0xff]
        %v418 = vld [vmem:[%s320 + $0x48] sm:$0xff]
        %v419 = vld [vmem:[%s320 + $0x50] sm:$0xff]
        %v420 = vld [vmem:[%s320 + $0x58] sm:$0xff]
        %v421 = vld [vmem:[%s320 + $0x60] sm:$0xff]
        %v422 = vld [vmem:[%s320 + $0x68] sm:$0xff]
        %v423 = vld [vmem:[%s320 + $0x70] sm:$0xff]
        %v424 = vld [vmem:[%s320 + $0x78] sm:$0xff]
        %v425 = vld [vmem:[%s320 + $0x80] sm:$0xff]
        %v426 = vld [vmem:[%s320 + $0x88] sm:$0xff]
        %v427 = vld [vmem:[%s320 + $0x90] sm:$0xff]
        %v428 = vld [vmem:[%s320 + $0x98] sm:$0xff]
        %v429 = vld [vmem:[%s320 + $0xa0] sm:$0xff]
        %v430 = vld [vmem:[%s320 + $0xa8] sm:$0xff]
        %v431 = vld [vmem:[%s320 + $0xb0] sm:$0xff]
        %v432 = vld [vmem:[%s320 + $0xb8] sm:$0xff]
        %v433 = vld [vmem:[%s320 + $0xc0] sm:$0xff]
        %v434 = vld [vmem:[%s320 + $0xc8] sm:$0xff]
        %v435 = vld [vmem:[%s320 + $0xd0] sm:$0xff]
        %v436 = vld [vmem:[%s320 + $0xd8] sm:$0xff]
        %v437 = vld [vmem:[%s320 + $0xe0] sm:$0xff]
        %v438 = vld [vmem:[%s320 + $0xe8] sm:$0xff]
        %v439 = vld [vmem:[%s320 + $0xf0] sm:$0xff]
        %v440 = vld [vmem:[%s320 + $0xf8] sm:$0xff]
        %v441 = vld [vmem:[%s320 + $0x100] sm:$0xff]
        %v442 = vld [vmem:[%s320 + $0x108] sm:$0xff]
        %v443 = vld [vmem:[%s320 + $0x110] sm:$0xff]
        %v444 = vld [vmem:[%s320 + $0x118] sm:$0xff]
        %v445 = vld [vmem:[%s320 + $0x120] sm:$0xff]
        %v446 = vld [vmem:[%s320 + $0x128] sm:$0xff]
        %v447 = vld [vmem:[%s320 + $0x130] sm:$0xff]
        %v448 = vld [vmem:[%s320 + $0x138] sm:$0xff]
        %v449 = vld [vmem:[%s320 + $0x140] sm:$0xff]
        %v450 = vld [vmem:[%s320 + $0x148] sm:$0xff]
        %v451 = vld [vmem:[%s320 + $0x150] sm:$0xff]
        %v452 = vld [vmem:[%s320 + $0x158] sm:$0xff]
        %v453 = vld [vmem:[%s320 + $0x160] sm:$0xff]
        %v454 = vld [vmem:[%s320 + $0x168] sm:$0xff]
        %v455 = vld [vmem:[%s320 + $0x170] sm:$0xff]
        %v456 = vld [vmem:[%s320 + $0x178] sm:$0xff]
        %v457 = vld [vmem:[%s320 + $0x180] sm:$0xff]
        %v458 = vld [vmem:[%s320 + $0x188] sm:$0xff]
        %v459 = vld [vmem:[%s320 + $0x190] sm:$0xff]
        %v460 = vld [vmem:[%s320 + $0x198] sm:$0xff]
        %v461 = vld [vmem:[%s320 + $0x1a0] sm:$0xff]
        %v462 = vld [vmem:[%s320 + $0x1a8] sm:$0xff]
        %v463 = vld [vmem:[%s320 + $0x1b0] sm:$0xff]
        %v464 = vld [vmem:[%s320 + $0x1b8] sm:$0xff]
        %v465 = vld [vmem:[%s320 + $0x1c0] sm:$0xff]
        %v466 = vld [vmem:[%s320 + $0x1c8] sm:$0xff]
        %v467 = vld [vmem:[%s320 + $0x1d0] sm:$0xff]
        %v468 = vld [vmem:[%s320 + $0x1d8] sm:$0xff]
        %v469 = vld [vmem:[%s320 + $0x1e0] sm:$0xff]
        %v470 = vld [vmem:[%s320 + $0x1e8] sm:$0xff]
        %v471 = vld [vmem:[%s320 + $0x1f0] sm:$0xff]
        %v472 = vld [vmem:[%s320 + $0x1f8] sm:$0xff]
        %v474 = vsel %vm392, %v367, 0
        %v477 = vsel %vm392, %v368, 0
        %479 = vmatprep.subr.mxu0 0.0
        %480 = vmatpush1.msra.mxu0 %v401
        %481 = vmatprep.subr.mxu0 0.0
        %482 = vmatpush1.msra.mxu0 %v402
        %483 = vmatprep.subr.mxu0 0.0
        %484 = vmatpush1.msra.mxu0 0.0
        %485 = vmatprep.subr.mxu0 0.0
        %486 = vmatpush1.msra.mxu0 0.0
        %487 = vmatprep.subr.mxu0 0.0
        %488 = vmatpush1.msra.mxu0 0.0
        %489 = vmatprep.subr.mxu0 0.0
        %490 = vmatpush1.msra.mxu0 0.0
        %491 = vmatprep.subr.mxu0 0.0
        %492 = vmatpush1.msra.mxu0 0.0
        %493 = vmatprep.subr.mxu0 0.0
        %494 = vmatpush1.msra.mxu0 0.0
        %495 = vmatprep.subr.mxu0 0.0
        %496 = vmatpush1.msra.mxu0 0.0
        %497 = vmatprep.subr.mxu0 0.0
        %498 = vmatpush1.msra.mxu0 0.0
        %499 = vmatprep.subr.mxu0 0.0
        %500 = vmatpush1.msra.mxu0 0.0
        %501 = vmatprep.subr.mxu0 0.0
        %502 = vmatpush1.msra.mxu0 0.0
        %503 = vmatprep.subr.mxu0 0.0
        %504 = vmatpush1.msra.mxu0 0.0
        %505 = vmatprep.subr.mxu0 0.0
        %506 = vmatpush1.msra.mxu0 0.0
        %507 = vmatprep.subr.mxu0 0.0
        %508 = vmatpush1.msra.mxu0 0.0
        %509 = vmatprep.subr.mxu0 0.0
        %510 = vmatpush1.msra.mxu0 0.0
        %511 = vmatprep.subr.mxu0 0.0
        %512 = vmatpush1.msra.mxu0 0.0
        %513 = vmatprep.subr.mxu0 0.0
        %514 = vmatpush1.msra.mxu0 0.0
        %515 = vmatprep.subr.mxu0 0.0
        %516 = vmatpush1.msra.mxu0 0.0
        %517 = vmatprep.subr.mxu0 0.0
        %518 = vmatpush1.msra.mxu0 0.0
        %519 = vmatprep.subr.mxu0 0.0
        %520 = vmatpush1.msra.mxu0 0.0
        %521 = vmatprep.subr.mxu0 0.0
        %522 = vmatpush1.msra.mxu0 0.0
        %523 = vmatprep.subr.mxu0 0.0
        %524 = vmatpush1.msra.mxu0 0.0
        %525 = vmatprep.subr.mxu0 0.0
        %526 = vmatpush1.msra.mxu0 0.0
        %527 = vmatprep.subr.mxu0 0.0
        %528 = vmatpush1.msra.mxu0 0.0
        %529 = vmatprep.subr.mxu0 0.0
        %530 = vmatpush1.msra.mxu0 0.0
        %531 = vmatprep.subr.mxu0 0.0
        %532 = vmatpush1.msra.mxu0 0.0
        %533 = vmatprep.subr.mxu0 0.0
        %534 = vmatpush1.msra.mxu0 0.0
        %535 = vmatprep.subr.mxu0 0.0
        %536 = vmatpush1.msra.mxu0 0.0
        %537 = vmatprep.subr.mxu0 0.0
        %538 = vmatpush1.msra.mxu0 0.0
        %539 = vmatprep.subr.mxu0 0.0
        %540 = vmatpush1.msra.mxu0 0.0
        %541 = vmatprep.subr.mxu0 0.0
        %542 = vmatpush1.msra.mxu0 0.0
        %543 = vmatprep.mubr.f32.mxu0 0.0
        %544 = vmatmul.mubr.f32.gmra.mrb[0].mxu0 %v474
        %v545 = vpop.f32.mrb[0].mxu0
        %v546 = vadd.f32 0.0, %v545
        %v547 = vpop.f32.mrb[0].mxu0
        %548 = vmatprep.mubr.f32.mxu0 0.0
        %549 = vmatmul.mubr.f32.gmra.mrb[0].mxu0 %v477
        %v550 = vpop.f32.mrb[0].mxu0
        %v551 = vadd.f32 0.0, %v550
        %v552 = vpop.f32.mrb[0].mxu0
        %553 = vdwg.mxu0
        %v555 = vsel %vm392, %v369, 0
        %v558 = vsel %vm392, %v370, 0
        %560 = vmatprep.subr.mxu0 0.0
        %561 = vmatpush1.msra.mxu0 %v403
        %562 = vmatprep.subr.mxu0 0.0
        %563 = vmatpush1.msra.mxu0 %v404
        %564 = vmatprep.subr.mxu0 0.0
        %565 = vmatpush1.msra.mxu0 0.0
        %566 = vmatprep.subr.mxu0 0.0
        %567 = vmatpush1.msra.mxu0 0.0
        %568 = vmatprep.subr.mxu0 0.0
        %569 = vmatpush1.msra.mxu0 0.0
        %570 = vmatprep.subr.mxu0 0.0
        %571 = vmatpush1.msra.mxu0 0.0
        %572 = vmatprep.subr.mxu0 0.0
        %573 = vmatpush1.msra.mxu0 0.0
        %574 = vmatprep.subr.mxu0 0.0
        %575 = vmatpush1.msra.mxu0 0.0
        %576 = vmatprep.subr.mxu0 0.0
        %577 = vmatpush1.msra.mxu0 0.0
        %578 = vmatprep.subr.mxu0 0.0
        %579 = vmatpush1.msra.mxu0 0.0
        %580 = vmatprep.subr.mxu0 0.0
        %581 = vmatpush1.msra.mxu0 0.0
        %582 = vmatprep.subr.mxu0 0.0
        %583 = vmatpush1.msra.mxu0 0.0
        %584 = vmatprep.subr.mxu0 0.0
        %585 = vmatpush1.msra.mxu0 0.0
        %586 = vmatprep.subr.mxu0 0.0
        %587 = vmatpush1.msra.mxu0 0.0
        %588 = vmatprep.subr.mxu0 0.0
        %589 = vmatpush1.msra.mxu0 0.0
        %590 = vmatprep.subr.mxu0 0.0
        %591 = vmatpush1.msra.mxu0 0.0
        %592 = vmatprep.subr.mxu0 0.0
        %593 = vmatpush1.msra.mxu0 0.0
        %594 = vmatprep.subr.mxu0 0.0
        %595 = vmatpush1.msra.mxu0 0.0
        %596 = vmatprep.subr.mxu0 0.0
        %597 = vmatpush1.msra.mxu0 0.0
        %598 = vmatprep.subr.mxu0 0.0
        %599 = vmatpush1.msra.mxu0 0.0
        %600 = vmatprep.subr.mxu0 0.0
        %601 = vmatpush1.msra.mxu0 0.0
        %602 = vmatprep.subr.mxu0 0.0
        %603 = vmatpush1.msra.mxu0 0.0
        %604 = vmatprep.subr.mxu0 0.0
        %605 = vmatpush1.msra.mxu0 0.0
        %606 = vmatprep.subr.mxu0 0.0
        %607 = vmatpush1.msra.mxu0 0.0
        %608 = vmatprep.subr.mxu0 0.0
        %609 = vmatpush1.msra.mxu0 0.0
        %610 = vmatprep.subr.mxu0 0.0
        %611 = vmatpush1.msra.mxu0 0.0
        %612 = vmatprep.subr.mxu0 0.0
        %613 = vmatpush1.msra.mxu0 0.0
        %614 = vmatprep.subr.mxu0 0.0
        %615 = vmatpush1.msra.mxu0 0.0
        %616 = vmatprep.subr.mxu0 0.0
        %617 = vmatpush1.msra.mxu0 0.0
        %618 = vmatprep.subr.mxu0 0.0
        %619 = vmatpush1.msra.mxu0 0.0
        %620 = vmatprep.subr.mxu0 0.0
        %621 = vmatpush1.msra.mxu0 0.0
        %622 = vmatprep.subr.mxu0 0.0
        %623 = vmatpush1.msra.mxu0 0.0
        %624 = vmatprep.mubr.f32.mxu0 0.0
        %625 = vmatmul.mubr.f32.gmra.mrb[0].mxu0 %v555
        %v626 = vpop.f32.mrb[0].mxu0
        %v627 = vadd.f32 0.0, %v626
        %v628 = vpop.f32.mrb[0].mxu0
        %629 = vmatprep.mubr.f32.mxu0 0.0
        %630 = vmatmul.mubr.f32.gmra.mrb[0].mxu0 %v558
        %v631 = vpop.f32.mrb[0].mxu0
        %v632 = vadd.f32 0.0, %v631
        %v633 = vpop.f32.mrb[0].mxu0
        %634 = vdwg.mxu0
        %v636 = vsel %vm392, %v371, 0
        %v639 = vsel %vm392, %v372, 0
        %641 = vmatprep.subr.mxu0 0.0
        %642 = vmatpush1.msra.mxu0 %v405
        %643 = vmatprep.subr.mxu0 0.0
        %644 = vmatpush1.msra.mxu0 %v406
        %645 = vmatprep.subr.mxu0 0.0
        %646 = vmatpush1.msra.mxu0 0.0
        %647 = vmatprep.subr.mxu0 0.0
        %648 = vmatpush1.msra.mxu0 0.0
        %649 = vmatprep.subr.mxu0 0.0
        %650 = vmatpush1.msra.mxu0 0.0
        %651 = vmatprep.subr.mxu0 0.0
        %652 = vmatpush1.msra.mxu0 0.0
        %653 = vmatprep.subr.mxu0 0.0
        %654 = vmatpush1.msra.mxu0 0.0
        %655 = vmatprep.subr.mxu0 0.0
        %656 = vmatpush1.msra.mxu0 0.0
        %657 = vmatprep.subr.mxu0 0.0
        %658 = vmatpush1.msra.mxu0 0.0
        %659 = vmatprep.subr.mxu0 0.0
        %660 = vmatpush1.msra.mxu0 0.0
        %661 = vmatprep.subr.mxu0 0.0
        %662 = vmatpush1.msra.mxu0 0.0
        %663 = vmatprep.subr.mxu0 0.0
        %664 = vmatpush1.msra.mxu0 0.0
        %665 = vmatprep.subr.mxu0 0.0
        %666 = vmatpush1.msra.mxu0 0.0
        %667 = vmatprep.subr.mxu0 0.0
        %668 = vmatpush1.msra.mxu0 0.0
        %669 = vmatprep.subr.mxu0 0.0
        %670 = vmatpush1.msra.mxu0 0.0
        %671 = vmatprep.subr.mxu0 0.0
        %672 = vmatpush1.msra.mxu0 0.0
        %673 = vmatprep.subr.mxu0 0.0
        %674 = vmatpush1.msra.mxu0 0.0
        %675 = vmatprep.subr.mxu0 0.0
        %676 = vmatpush1.msra.mxu0 0.0
        %677 = vmatprep.subr.mxu0 0.0
        %678 = vmatpush1.msra.mxu0 0.0
        %679 = vmatprep.subr.mxu0 0.0
        %680 = vmatpush1.msra.mxu0 0.0
        %681 = vmatprep.subr.mxu0 0.0
        %682 = vmatpush1.msra.mxu0 0.0
        %683 = vmatprep.subr.mxu0 0.0
        %684 = vmatpush1.msra.mxu0 0.0
        %685 = vmatprep.subr.mxu0 0.0
        %686 = vmatpush1.msra.mxu0 0.0
        %687 = vmatprep.subr.mxu0 0.0
        %688 = vmatpush1.msra.mxu0 0.0
        %689 = vmatprep.subr.mxu0 0.0
        %690 = vmatpush1.msra.mxu0 0.0
        %691 = vmatprep.subr.mxu0 0.0
        %692 = vmatpush1.msra.mxu0 0.0
        %693 = vmatprep.subr.mxu0 0.0
        %694 = vmatpush1.msra.mxu0 0.0
        %695 = vmatprep.subr.mxu0 0.0
        %696 = vmatpush1.msra.mxu0 0.0
        %697 = vmatprep.subr.mxu0 0.0
        %698 = vmatpush1.msra.mxu0 0.0
        %699 = vmatprep.subr.mxu0 0.0
        %700 = vmatpush1.msra.mxu0 0.0
        %701 = vmatprep.subr.mxu0 0.0
        %702 = vmatpush1.msra.mxu0 0.0
        %703 = vmatprep.subr.mxu0 0.0
        %704 = vmatpush1.msra.mxu0 0.0
        %705 = vmatprep.mubr.f32.mxu0 0.0
        %706 = vmatmul.mubr.f32.gmra.mrb[0].mxu0 %v636
        %v707 = vpop.f32.mrb[0].mxu0
        %v708 = vadd.f32 0.0, %v707
        %v709 = vpop.f32.mrb[0].mxu0
        %710 = vmatprep.mubr.f32.mxu0 0.0
        %711 = vmatmul.mubr.f32.gmra.mrb[0].mxu0 %v639
        %v712 = vpop.f32.mrb[0].mxu0
        %v713 = vadd.f32 0.0, %v712
        %v714 = vpop.f32.mrb[0].mxu0
        %715 = vdwg.mxu0
        %v717 = vsel %vm392, %v373, 0
        %v720 = vsel %vm392, %v374, 0
        %722 = vmatprep.subr.mxu0 0.0
        %723 = vmatpush1.msra.mxu0 %v407
        %724 = vmatprep.subr.mxu0 0.0
        %725 = vmatpush1.msra.mxu0 %v408
        %726 = vmatprep.subr.mxu0 0.0
        %727 = vmatpush1.msra.mxu0 0.0
        %728 = vmatprep.subr.mxu0 0.0
        %729 = vmatpush1.msra.mxu0 0.0
        %730 = vmatprep.subr.mxu0 0.0
        %731 = vmatpush1.msra.mxu0 0.0
        %732 = vmatprep.subr.mxu0 0.0
        %733 = vmatpush1.msra.mxu0 0.0
        %734 = vmatprep.subr.mxu0 0.0
        %735 = vmatpush1.msra.mxu0 0.0
        %736 = vmatprep.subr.mxu0 0.0
        %737 = vmatpush1.msra.mxu0 0.0
        %738 = vmatprep.subr.mxu0 0.0
        %739 = vmatpush1.msra.mxu0 0.0
        %740 = vmatprep.subr.mxu0 0.0
        %741 = vmatpush1.msra.mxu0 0.0
        %742 = vmatprep.subr.mxu0 0.0
        %743 = vmatpush1.msra.mxu0 0.0
        %744 = vmatprep.subr.mxu0 0.0
        %745 = vmatpush1.msra.mxu0 0.0
        %746 = vmatprep.subr.mxu0 0.0
        %747 = vmatpush1.msra.mxu0 0.0
        %748 = vmatprep.subr.mxu0 0.0
        %749 = vmatpush1.msra.mxu0 0.0
        %750 = vmatprep.subr.mxu0 0.0
        %751 = vmatpush1.msra.mxu0 0.0
        %752 = vmatprep.subr.mxu0 0.0
        %753 = vmatpush1.msra.mxu0 0.0
        %754 = vmatprep.subr.mxu0 0.0
        %755 = vmatpush1.msra.mxu0 0.0
        %756 = vmatprep.subr.mxu0 0.0
        %757 = vmatpush1.msra.mxu0 0.0
        %758 = vmatprep.subr.mxu0 0.0
        %759 = vmatpush1.msra.mxu0 0.0
        %760 = vmatprep.subr.mxu0 0.0
        %761 = vmatpush1.msra.mxu0 0.0
        %762 = vmatprep.subr.mxu0 0.0
        %763 = vmatpush1.msra.mxu0 0.0
        %764 = vmatprep.subr.mxu0 0.0
        %765 = vmatpush1.msra.mxu0 0.0
        %766 = vmatprep.subr.mxu0 0.0
        %767 = vmatpush1.msra.mxu0 0.0
        %768 = vmatprep.subr.mxu0 0.0
        %769 = vmatpush1.msra.mxu0 0.0
        %770 = vmatprep.subr.mxu0 0.0
        %771 = vmatpush1.msra.mxu0 0.0
        %772 = vmatprep.subr.mxu0 0.0
        %773 = vmatpush1.msra.mxu0 0.0
        %774 = vmatprep.subr.mxu0 0.0
        %775 = vmatpush1.msra.mxu0 0.0
        %776 = vmatprep.subr.mxu0 0.0
        %777 = vmatpush1.msra.mxu0 0.0
        %778 = vmatprep.subr.mxu0 0.0
        %779 = vmatpush1.msra.mxu0 0.0
        %780 = vmatprep.subr.mxu0 0.0
        %781 = vmatpush1.msra.mxu0 0.0
        %782 = vmatprep.subr.mxu0 0.0
        %783 = vmatpush1.msra.mxu0 0.0
        %784 = vmatprep.subr.mxu0 0.0
        %785 = vmatpush1.msra.mxu0 0.0
        %786 = vmatprep.mubr.f32.mxu0 0.0
        %787 = vmatmul.mubr.f32.gmra.mrb[0].mxu0 %v717
        %v788 = vpop.f32.mrb[0].mxu0
        %v789 = vadd.f32 0.0, %v788
        %v790 = vpop.f32.mrb[0].mxu0
        %791 = vmatprep.mubr.f32.mxu0 0.0
        %792 = vmatmul.mubr.f32.gmra.mrb[0].mxu0 %v720
        %v793 = vpop.f32.mrb[0].mxu0
        %v794 = vadd.f32 0.0, %v793
        %v795 = vpop.f32.mrb[0].mxu0
        %796 = vdwg.mxu0
        %v797 = vlaneseq
        %v798 = vand.u32 %v797, 127
        %vm799 = vcmp.lt.s32.totalorder %v798, 8
        %v800 = vsel %vm799, %v546, -1e+30
        %v801 = vsel %vm799, %v551, -1e+30
        %v802 = vsel %vm799, %v627, -1e+30
        %v803 = vsel %vm799, %v632, -1e+30
        %v804 = vsel %vm799, %v708, -1e+30
        %v805 = vsel %vm799, %v713, -1e+30
        %v806 = vsel %vm799, %v789, -1e+30
        %v807 = vsel %vm799, %v794, -1e+30
        %v808 = vld [vmem:[#allocation2] sm:$0xff]
        %v809 = vld [vmem:[#allocation2 + $0x8] sm:$0xff]
        %v810 = vld [vmem:[#allocation2 + $0x10] sm:$0xff]
        %v811 = vld [vmem:[#allocation2 + $0x18] sm:$0xff]
        %v812 = vld [vmem:[#allocation2 + $0x20] sm:$0xff]
        %v813 = vld [vmem:[#allocation2 + $0x28] sm:$0xff]
        %v814 = vld [vmem:[#allocation2 + $0x30] sm:$0xff]
        %v815 = vld [vmem:[#allocation2 + $0x38] sm:$0xff]
        %816 = vmax.xlane.f32.xlu0 %v800
        %v817 = vpop.xlane.xlu0 %816
        %818 = vmax.xlane.f32.xlu0 %v801
        %v819 = vpop.xlane.xlu0 %818
        %820 = vmax.xlane.f32.xlu0 %v802
        %v821 = vpop.xlane.xlu0 %820
        %822 = vmax.xlane.f32.xlu0 %v803
        %v823 = vpop.xlane.xlu0 %822
        %824 = vmax.xlane.f32.xlu0 %v804
        %v825 = vpop.xlane.xlu0 %824
        %826 = vmax.xlane.f32.xlu0 %v805
        %v827 = vpop.xlane.xlu0 %826
        %828 = vmax.xlane.f32.xlu0 %v806
        %v829 = vpop.xlane.xlu0 %828
        %830 = vmax.xlane.f32.xlu0 %v807
        %v831 = vpop.xlane.xlu0 %830
        %v832 = vmax.f32 %v808, %v817
        %v833 = vmax.f32 %v809, %v819
        %v834 = vmax.f32 %v810, %v821
        %v835 = vmax.f32 %v811, %v823
        %v836 = vmax.f32 %v812, %v825
        %v837 = vmax.f32 %v813, %v827
        %v838 = vmax.f32 %v814, %v829
        %v839 = vmax.f32 %v815, %v831
        %v840 = vsub.f32 %v808, %v832
        %v841 = vsub.f32 %v809, %v833
        %v842 = vsub.f32 %v810, %v834
        %v843 = vsub.f32 %v811, %v835
        %v844 = vsub.f32 %v812, %v836
        %v845 = vsub.f32 %v813, %v837
        %v846 = vsub.f32 %v814, %v838
        %v847 = vsub.f32 %v815, %v839
        %v848 = vmul.f32 %v840, 1.442695
        %v849 = vpow.pop %v848
        %v850 = vmul.f32 %v841, 1.442695
        %v851 = vpow.pop %v850
        %v852 = vmul.f32 %v842, 1.442695
        %v853 = vpow.pop %v852
        %v854 = vmul.f32 %v843, 1.442695
        %v855 = vpow.pop %v854
        %v856 = vmul.f32 %v844, 1.442695
        %v857 = vpow.pop %v856
        %v858 = vmul.f32 %v845, 1.442695
        %v859 = vpow.pop %v858
        %v860 = vmul.f32 %v846, 1.442695
        %v861 = vpow.pop %v860
        %v862 = vmul.f32 %v847, 1.442695
        %v863 = vpow.pop %v862
        %865 = vset.pattern.permute.xlu0 0
        %866 = vperm.xlu0 %865, %v832
        %v867 = vpop.permute.xlu0 %866
        %870 = vset.pattern.permute.xlu0 0
        %871 = vperm.xlu0 %870, %v833
        %v872 = vpop.permute.xlu0 %871
        %875 = vset.pattern.permute.xlu0 0
        %876 = vperm.xlu0 %875, %v834
        %v877 = vpop.permute.xlu0 %876
        %880 = vset.pattern.permute.xlu0 0
        %881 = vperm.xlu0 %880, %v835
        %v882 = vpop.permute.xlu0 %881
        %885 = vset.pattern.permute.xlu0 0
        %886 = vperm.xlu0 %885, %v836
        %v887 = vpop.permute.xlu0 %886
        %890 = vset.pattern.permute.xlu0 0
        %891 = vperm.xlu0 %890, %v837
        %v892 = vpop.permute.xlu0 %891
        %895 = vset.pattern.permute.xlu0 0
        %896 = vperm.xlu0 %895, %v838
        %v897 = vpop.permute.xlu0 %896
        %900 = vset.pattern.permute.xlu0 0
        %901 = vperm.xlu0 %900, %v839
        %v902 = vpop.permute.xlu0 %901
        %v904 = vsub.f32 %v800, %v867
        %v905 = vsub.f32 %v801, %v872
        %v906 = vsub.f32 %v802, %v877
        %v907 = vsub.f32 %v803, %v882
        %v908 = vsub.f32 %v804, %v887
        %v909 = vsub.f32 %v805, %v892
        %v910 = vsub.f32 %v806, %v897
        %v911 = vsub.f32 %v807, %v902
        %v912 = vmul.f32 %v904, 1.442695
        %v913 = vpow.pop %v912
        %v914 = vmul.f32 %v905, 1.442695
        %v915 = vpow.pop %v914
        %v916 = vmul.f32 %v906, 1.442695
        %v917 = vpow.pop %v916
        %v918 = vmul.f32 %v907, 1.442695
        %v919 = vpow.pop %v918
        %v920 = vmul.f32 %v908, 1.442695
        %v921 = vpow.pop %v920
        %v922 = vmul.f32 %v909, 1.442695
        %v923 = vpow.pop %v922
        %v924 = vmul.f32 %v910, 1.442695
        %v925 = vpow.pop %v924
        %v926 = vmul.f32 %v911, 1.442695
        %v927 = vpow.pop %v926
        %v928 = vld [vmem:[#allocation3] sm:$0xff]
        %v929 = vld [vmem:[#allocation3 + $0x8] sm:$0xff]
        %v930 = vld [vmem:[#allocation3 + $0x10] sm:$0xff]
        %v931 = vld [vmem:[#allocation3 + $0x18] sm:$0xff]
        %v932 = vld [vmem:[#allocation3 + $0x20] sm:$0xff]
        %v933 = vld [vmem:[#allocation3 + $0x28] sm:$0xff]
        %v934 = vld [vmem:[#allocation3 + $0x30] sm:$0xff]
        %v935 = vld [vmem:[#allocation3 + $0x38] sm:$0xff]
        %v936 = vmul.f32 %v849, %v928
        %v937 = vmul.f32 %v851, %v929
        %v938 = vmul.f32 %v853, %v930
        %v939 = vmul.f32 %v855, %v931
        %v940 = vmul.f32 %v857, %v932
        %v941 = vmul.f32 %v859, %v933
        %v942 = vmul.f32 %v861, %v934
        %v943 = vmul.f32 %v863, %v935
        %944 = vadd.xlane.f32.xlu0 %v913
        %v945 = vpop.xlane.xlu0 %944
        %946 = vadd.xlane.f32.xlu0 %v915
        %v947 = vpop.xlane.xlu0 %946
        %948 = vadd.xlane.f32.xlu0 %v917
        %v949 = vpop.xlane.xlu0 %948
        %950 = vadd.xlane.f32.xlu0 %v919
        %v951 = vpop.xlane.xlu0 %950
        %952 = vadd.xlane.f32.xlu0 %v921
        %v953 = vpop.xlane.xlu0 %952
        %954 = vadd.xlane.f32.xlu0 %v923
        %v955 = vpop.xlane.xlu0 %954
        %956 = vadd.xlane.f32.xlu0 %v925
        %v957 = vpop.xlane.xlu0 %956
        %958 = vadd.xlane.f32.xlu0 %v927
        %v959 = vpop.xlane.xlu0 %958
        %v960 = vadd.f32 %v936, %v945
        %v961 = vadd.f32 %v937, %v947
        %v962 = vadd.f32 %v938, %v949
        %v963 = vadd.f32 %v939, %v951
        %v964 = vadd.f32 %v940, %v953
        %v965 = vadd.f32 %v941, %v955
        %v966 = vadd.f32 %v942, %v957
        %v967 = vadd.f32 %v943, %v959
        %968 = vst.msk [vmem:[#allocation3] sm:$0xff] %vm375, %v960
        %969 = vst.msk [vmem:[#allocation3 + $0x8] sm:$0xff] %vm375, %v961
        %970 = vst.msk [vmem:[#allocation3 + $0x10] sm:$0xff] %vm375, %v962
        %971 = vst.msk [vmem:[#allocation3 + $0x18] sm:$0xff] %vm375, %v963
        %972 = vst.msk [vmem:[#allocation3 + $0x20] sm:$0xff] %vm375, %v964
        %973 = vst.msk [vmem:[#allocation3 + $0x28] sm:$0xff] %vm375, %v965
        %974 = vst.msk [vmem:[#allocation3 + $0x30] sm:$0xff] %vm375, %v966
        %975 = vst.msk [vmem:[#allocation3 + $0x38] sm:$0xff] %vm375, %v967
        %v976 = vld [vmem:[#allocation4] sm:$0xff]
        %v977 = vld [vmem:[#allocation4 + $0x8] sm:$0xff]
        %v978 = vld [vmem:[#allocation4 + $0x10] sm:$0xff]
        %v979 = vld [vmem:[#allocation4 + $0x18] sm:$0xff]
        %v980 = vld [vmem:[#allocation4 + $0x20] sm:$0xff]
        %v981 = vld [vmem:[#allocation4 + $0x28] sm:$0xff]
        %v982 = vld [vmem:[#allocation4 + $0x30] sm:$0xff]
        %v983 = vld [vmem:[#allocation4 + $0x38] sm:$0xff]
        %985 = vset.pattern.permute.xlu0 0
        %986 = vperm.xlu0 %985, %v849
        %v987 = vpop.permute.xlu0 %986
        %990 = vset.pattern.permute.xlu0 0
        %991 = vperm.xlu0 %990, %v851
        %v992 = vpop.permute.xlu0 %991
        %995 = vset.pattern.permute.xlu0 0
        %996 = vperm.xlu0 %995, %v853
        %v997 = vpop.permute.xlu0 %996
        %1000 = vset.pattern.permute.xlu0 0
        %1001 = vperm.xlu0 %1000, %v855
        %v1002 = vpop.permute.xlu0 %1001
        %1005 = vset.pattern.permute.xlu0 0
        %1006 = vperm.xlu0 %1005, %v857
        %v1007 = vpop.permute.xlu0 %1006
        %1010 = vset.pattern.permute.xlu0 0
        %1011 = vperm.xlu0 %1010, %v859
        %v1012 = vpop.permute.xlu0 %1011
        %1015 = vset.pattern.permute.xlu0 0
        %1016 = vperm.xlu0 %1015, %v861
        %v1017 = vpop.permute.xlu0 %1016
        %1020 = vset.pattern.permute.xlu0 0
        %1021 = vperm.xlu0 %1020, %v863
        %v1022 = vpop.permute.xlu0 %1021
        %v1024 = vmul.f32 %v987, %v976
        %v1025 = vmul.f32 %v992, %v977
        %v1026 = vmul.f32 %v997, %v978
        %v1027 = vmul.f32 %v1002, %v979
        %v1028 = vmul.f32 %v1007, %v980
        %v1029 = vmul.f32 %v1012, %v981
        %v1030 = vmul.f32 %v1017, %v982
        %v1031 = vmul.f32 %v1022, %v983
        %1032 = vmatprep.subr.mxu0 0.0
        %1033 = vmatpush1.msra.mxu0 %v409
        %1034 = vmatprep.subr.mxu0 0.0
        %1035 = vmatpush1.msra.mxu0 %v410
        %1036 = vmatprep.subr.mxu0 0.0
        %1037 = vmatpush1.msra.mxu0 %v411
        %1038 = vmatprep.subr.mxu0 0.0
        %1039 = vmatpush1.msra.mxu0 %v412
        %1040 = vmatprep.subr.mxu0 0.0
        %1041 = vmatpush1.msra.mxu0 %v413
        %1042 = vmatprep.subr.mxu0 0.0
        %1043 = vmatpush1.msra.mxu0 %v414
        %1044 = vmatprep.subr.mxu0 0.0
        %1045 = vmatpush1.msra.mxu0 %v415
        %1046 = vmatprep.subr.mxu0 0.0
        %1047 = vmatpush1.msra.mxu0 %v416
        %1048 = vmatprep.subr.mxu0 0.0
        %1049 = vmatpush1.msra.mxu0 %v417
        %1050 = vmatprep.subr.mxu0 0.0
        %1051 = vmatpush1.msra.mxu0 %v418
        %1052 = vmatprep.subr.mxu0 0.0
        %1053 = vmatpush1.msra.mxu0 %v419
        %1054 = vmatprep.subr.mxu0 0.0
        %1055 = vmatpush1.msra.mxu0 %v420
        %1056 = vmatprep.subr.mxu0 0.0
        %1057 = vmatpush1.msra.mxu0 %v421
        %1058 = vmatprep.subr.mxu0 0.0
        %1059 = vmatpush1.msra.mxu0 %v422
        %1060 = vmatprep.subr.mxu0 0.0
        %1061 = vmatpush1.msra.mxu0 %v423
        %1062 = vmatprep.subr.mxu0 0.0
        %1063 = vmatpush1.msra.mxu0 %v424
        %1064 = vmatprep.subr.mxu0 0.0
        %1065 = vmatpush1.msra.mxu0 0.0
        %1066 = vmatprep.subr.mxu0 0.0
        %1067 = vmatpush1.msra.mxu0 0.0
        %1068 = vmatprep.subr.mxu0 0.0
        %1069 = vmatpush1.msra.mxu0 0.0
        %1070 = vmatprep.subr.mxu0 0.0
        %1071 = vmatpush1.msra.mxu0 0.0
        %1072 = vmatprep.subr.mxu0 0.0
        %1073 = vmatpush1.msra.mxu0 0.0
        %1074 = vmatprep.subr.mxu0 0.0
        %1075 = vmatpush1.msra.mxu0 0.0
        %1076 = vmatprep.subr.mxu0 0.0
        %1077 = vmatpush1.msra.mxu0 0.0
        %1078 = vmatprep.subr.mxu0 0.0
        %1079 = vmatpush1.msra.mxu0 0.0
        %1080 = vmatprep.subr.mxu0 0.0
        %1081 = vmatpush1.msra.mxu0 0.0
        %1082 = vmatprep.subr.mxu0 0.0
        %1083 = vmatpush1.msra.mxu0 0.0
        %1084 = vmatprep.subr.mxu0 0.0
        %1085 = vmatpush1.msra.mxu0 0.0
        %1086 = vmatprep.subr.mxu0 0.0
        %1087 = vmatpush1.msra.mxu0 0.0
        %1088 = vmatprep.subr.mxu0 0.0
        %1089 = vmatpush1.msra.mxu0 0.0
        %1090 = vmatprep.subr.mxu0 0.0
        %1091 = vmatpush1.msra.mxu0 0.0
        %1092 = vmatprep.subr.mxu0 0.0
        %1093 = vmatpush1.msra.mxu0 0.0
        %1094 = vmatprep.subr.mxu0 0.0
        %1095 = vmatpush1.msra.mxu0 0.0
        %1096 = vmatprep.mubr.f32.mxu0 0.0
        %1097 = vmatmul.mubr.f32.gmra.mrb[0].mxu0 %v913
        %v1098 = vpop.f32.mrb[0].mxu0
        %v1099 = vadd.f32 0.0, %v1098
        %v1100 = vpop.f32.mrb[0].mxu0
        %1101 = vmatprep.mubr.f32.mxu0 0.0
        %1102 = vmatmul.mubr.f32.gmra.mrb[0].mxu0 %v915
        %v1103 = vpop.f32.mrb[0].mxu0
        %v1104 = vadd.f32 0.0, %v1103
        %v1105 = vpop.f32.mrb[0].mxu0
        %1106 = vdwg.mxu0
        %1107 = vmatprep.subr.mxu0 0.0
        %1108 = vmatpush1.msra.mxu0 %v425
        %1109 = vmatprep.subr.mxu0 0.0
        %1110 = vmatpush1.msra.mxu0 %v426
        %1111 = vmatprep.subr.mxu0 0.0
        %1112 = vmatpush1.msra.mxu0 %v427
        %1113 = vmatprep.subr.mxu0 0.0
        %1114 = vmatpush1.msra.mxu0 %v428
        %1115 = vmatprep.subr.mxu0 0.0
        %1116 = vmatpush1.msra.mxu0 %v429
        %1117 = vmatprep.subr.mxu0 0.0
        %1118 = vmatpush1.msra.mxu0 %v430
        %1119 = vmatprep.subr.mxu0 0.0
        %1120 = vmatpush1.msra.mxu0 %v431
        %1121 = vmatprep.subr.mxu0 0.0
        %1122 = vmatpush1.msra.mxu0 %v432
        %1123 = vmatprep.subr.mxu0 0.0
        %1124 = vmatpush1.msra.mxu0 %v433
        %1125 = vmatprep.subr.mxu0 0.0
        %1126 = vmatpush1.msra.mxu0 %v434
        %1127 = vmatprep.subr.mxu0 0.0
        %1128 = vmatpush1.msra.mxu0 %v435
        %1129 = vmatprep.subr.mxu0 0.0
        %1130 = vmatpush1.msra.mxu0 %v436
        %1131 = vmatprep.subr.mxu0 0.0
        %1132 = vmatpush1.msra.mxu0 %v437
        %1133 = vmatprep.subr.mxu0 0.0
        %1134 = vmatpush1.msra.mxu0 %v438
        %1135 = vmatprep.subr.mxu0 0.0
        %1136 = vmatpush1.msra.mxu0 %v439
        %1137 = vmatprep.subr.mxu0 0.0
        %1138 = vmatpush1.msra.mxu0 %v440
        %1139 = vmatprep.subr.mxu0 0.0
        %1140 = vmatpush1.msra.mxu0 0.0
        %1141 = vmatprep.subr.mxu0 0.0
        %1142 = vmatpush1.msra.mxu0 0.0
        %1143 = vmatprep.subr.mxu0 0.0
        %1144 = vmatpush1.msra.mxu0 0.0
        %1145 = vmatprep.subr.mxu0 0.0
        %1146 = vmatpush1.msra.mxu0 0.0
        %1147 = vmatprep.subr.mxu0 0.0
        %1148 = vmatpush1.msra.mxu0 0.0
        %1149 = vmatprep.subr.mxu0 0.0
        %1150 = vmatpush1.msra.mxu0 0.0
        %1151 = vmatprep.subr.mxu0 0.0
        %1152 = vmatpush1.msra.mxu0 0.0
        %1153 = vmatprep.subr.mxu0 0.0
        %1154 = vmatpush1.msra.mxu0 0.0
        %1155 = vmatprep.subr.mxu0 0.0
        %1156 = vmatpush1.msra.mxu0 0.0
        %1157 = vmatprep.subr.mxu0 0.0
        %1158 = vmatpush1.msra.mxu0 0.0
        %1159 = vmatprep.subr.mxu0 0.0
        %1160 = vmatpush1.msra.mxu0 0.0
        %1161 = vmatprep.subr.mxu0 0.0
        %1162 = vmatpush1.msra.mxu0 0.0
        %1163 = vmatprep.subr.mxu0 0.0
        %1164 = vmatpush1.msra.mxu0 0.0
        %1165 = vmatprep.subr.mxu0 0.0
        %1166 = vmatpush1.msra.mxu0 0.0
        %1167 = vmatprep.subr.mxu0 0.0
        %1168 = vmatpush1.msra.mxu0 0.0
        %1169 = vmatprep.subr.mxu0 0.0
        %1170 = vmatpush1.msra.mxu0 0.0
        %1171 = vmatprep.mubr.f32.mxu0 0.0
        %1172 = vmatmul.mubr.f32.gmra.mrb[0].mxu0 %v917
        %v1173 = vpop.f32.mrb[0].mxu0
        %v1174 = vadd.f32 0.0, %v1173
        %v1175 = vpop.f32.mrb[0].mxu0
        %1176 = vmatprep.mubr.f32.mxu0 0.0
        %1177 = vmatmul.mubr.f32.gmra.mrb[0].mxu0 %v919
        %v1178 = vpop.f32.mrb[0].mxu0
        %v1179 = vadd.f32 0.0, %v1178
        %v1180 = vpop.f32.mrb[0].mxu0
        %1181 = vdwg.mxu0
        %1182 = vmatprep.subr.mxu0 0.0
        %1183 = vmatpush1.msra.mxu0 %v441
        %1184 = vmatprep.subr.mxu0 0.0
        %1185 = vmatpush1.msra.mxu0 %v442
        %1186 = vmatprep.subr.mxu0 0.0
        %1187 = vmatpush1.msra.mxu0 %v443
        %1188 = vmatprep.subr.mxu0 0.0
        %1189 = vmatpush1.msra.mxu0 %v444
        %1190 = vmatprep.subr.mxu0 0.0
        %1191 = vmatpush1.msra.mxu0 %v445
        %1192 = vmatprep.subr.mxu0 0.0
        %1193 = vmatpush1.msra.mxu0 %v446
        %1194 = vmatprep.subr.mxu0 0.0
        %1195 = vmatpush1.msra.mxu0 %v447
        %1196 = vmatprep.subr.mxu0 0.0
        %1197 = vmatpush1.msra.mxu0 %v448
        %1198 = vmatprep.subr.mxu0 0.0
        %1199 = vmatpush1.msra.mxu0 %v449
        %1200 = vmatprep.subr.mxu0 0.0
        %1201 = vmatpush1.msra.mxu0 %v450
        %1202 = vmatprep.subr.mxu0 0.0
        %1203 = vmatpush1.msra.mxu0 %v451
        %1204 = vmatprep.subr.mxu0 0.0
        %1205 = vmatpush1.msra.mxu0 %v452
        %1206 = vmatprep.subr.mxu0 0.0
        %1207 = vmatpush1.msra.mxu0 %v453
        %1208 = vmatprep.subr.mxu0 0.0
        %1209 = vmatpush1.msra.mxu0 %v454
        %1210 = vmatprep.subr.mxu0 0.0
        %1211 = vmatpush1.msra.mxu0 %v455
        %1212 = vmatprep.subr.mxu0 0.0
        %1213 = vmatpush1.msra.mxu0 %v456
        %1214 = vmatprep.subr.mxu0 0.0
        %1215 = vmatpush1.msra.mxu0 0.0
        %1216 = vmatprep.subr.mxu0 0.0
        %1217 = vmatpush1.msra.mxu0 0.0
        %1218 = vmatprep.subr.mxu0 0.0
        %1219 = vmatpush1.msra.mxu0 0.0
        %1220 = vmatprep.subr.mxu0 0.0
        %1221 = vmatpush1.msra.mxu0 0.0
        %1222 = vmatprep.subr.mxu0 0.0
        %1223 = vmatpush1.msra.mxu0 0.0
        %1224 = vmatprep.subr.mxu0 0.0
        %1225 = vmatpush1.msra.mxu0 0.0
        %1226 = vmatprep.subr.mxu0 0.0
        %1227 = vmatpush1.msra.mxu0 0.0
        %1228 = vmatprep.subr.mxu0 0.0
        %1229 = vmatpush1.msra.mxu0 0.0
        %1230 = vmatprep.subr.mxu0 0.0
        %1231 = vmatpush1.msra.mxu0 0.0
        %1232 = vmatprep.subr.mxu0 0.0
        %1233 = vmatpush1.msra.mxu0 0.0
        %1234 = vmatprep.subr.mxu0 0.0
        %1235 = vmatpush1.msra.mxu0 0.0
        %1236 = vmatprep.subr.mxu0 0.0
        %1237 = vmatpush1.msra.mxu0 0.0
        %1238 = vmatprep.subr.mxu0 0.0
        %1239 = vmatpush1.msra.mxu0 0.0
        %1240 = vmatprep.subr.mxu0 0.0
        %1241 = vmatpush1.msra.mxu0 0.0
        %1242 = vmatprep.subr.mxu0 0.0
        %1243 = vmatpush1.msra.mxu0 0.0
        %1244 = vmatprep.subr.mxu0 0.0
        %1245 = vmatpush1.msra.mxu0 0.0
        %1246 = vmatprep.mubr.f32.mxu0 0.0
        %1247 = vmatmul.mubr.f32.gmra.mrb[0].mxu0 %v921
        %v1248 = vpop.f32.mrb[0].mxu0
        %v1249 = vadd.f32 0.0, %v1248
        %v1250 = vpop.f32.mrb[0].mxu0
        %1251 = vmatprep.mubr.f32.mxu0 0.0
        %1252 = vmatmul.mubr.f32.gmra.mrb[0].mxu0 %v923
        %v1253 = vpop.f32.mrb[0].mxu0
        %v1254 = vadd.f32 0.0, %v1253
        %v1255 = vpop.f32.mrb[0].mxu0
        %1256 = vdwg.mxu0
        %1257 = vmatprep.subr.mxu0 0.0
        %1258 = vmatpush1.msra.mxu0 %v457
        %1259 = vmatprep.subr.mxu0 0.0
        %1260 = vmatpush1.msra.mxu0 %v458
        %1261 = vmatprep.subr.mxu0 0.0
        %1262 = vmatpush1.msra.mxu0 %v459
        %1263 = vmatprep.subr.mxu0 0.0
        %1264 = vmatpush1.msra.mxu0 %v460
        %1265 = vmatprep.subr.mxu0 0.0
        %1266 = vmatpush1.msra.mxu0 %v461
        %1267 = vmatprep.subr.mxu0 0.0
        %1268 = vmatpush1.msra.mxu0 %v462
        %1269 = vmatprep.subr.mxu0 0.0
        %1270 = vmatpush1.msra.mxu0 %v463
        %1271 = vmatprep.subr.mxu0 0.0
        %1272 = vmatpush1.msra.mxu0 %v464
        %1273 = vmatprep.subr.mxu0 0.0
        %1274 = vmatpush1.msra.mxu0 %v465
        %1275 = vmatprep.subr.mxu0 0.0
        %1276 = vmatpush1.msra.mxu0 %v466
        %1277 = vmatprep.subr.mxu0 0.0
        %1278 = vmatpush1.msra.mxu0 %v467
        %1279 = vmatprep.subr.mxu0 0.0
        %1280 = vmatpush1.msra.mxu0 %v468
        %1281 = vmatprep.subr.mxu0 0.0
        %1282 = vmatpush1.msra.mxu0 %v469
        %1283 = vmatprep.subr.mxu0 0.0
        %1284 = vmatpush1.msra.mxu0 %v470
        %1285 = vmatprep.subr.mxu0 0.0
        %1286 = vmatpush1.msra.mxu0 %v471
        %1287 = vmatprep.subr.mxu0 0.0
        %1288 = vmatpush1.msra.mxu0 %v472
        %1289 = vmatprep.subr.mxu0 0.0
        %1290 = vmatpush1.msra.mxu0 0.0
        %1291 = vmatprep.subr.mxu0 0.0
        %1292 = vmatpush1.msra.mxu0 0.0
        %1293 = vmatprep.subr.mxu0 0.0
        %1294 = vmatpush1.msra.mxu0 0.0
        %1295 = vmatprep.subr.mxu0 0.0
        %1296 = vmatpush1.msra.mxu0 0.0
        %1297 = vmatprep.subr.mxu0 0.0
        %1298 = vmatpush1.msra.mxu0 0.0
        %1299 = vmatprep.subr.mxu0 0.0
        %1300 = vmatpush1.msra.mxu0 0.0
        %1301 = vmatprep.subr.mxu0 0.0
        %1302 = vmatpush1.msra.mxu0 0.0
        %1303 = vmatprep.subr.mxu0 0.0
        %1304 = vmatpush1.msra.mxu0 0.0
        %1305 = vmatprep.subr.mxu0 0.0
        %1306 = vmatpush1.msra.mxu0 0.0
        %1307 = vmatprep.subr.mxu0 0.0
        %1308 = vmatpush1.msra.mxu0 0.0
        %1309 = vmatprep.subr.mxu0 0.0
        %1310 = vmatpush1.msra.mxu0 0.0
        %1311 = vmatprep.subr.mxu0 0.0
        %1312 = vmatpush1.msra.mxu0 0.0
        %1313 = vmatprep.subr.mxu0 0.0
        %1314 = vmatpush1.msra.mxu0 0.0
        %1315 = vmatprep.subr.mxu0 0.0
        %1316 = vmatpush1.msra.mxu0 0.0
        %1317 = vmatprep.subr.mxu0 0.0
        %1318 = vmatpush1.msra.mxu0 0.0
        %1319 = vmatprep.subr.mxu0 0.0
        %1320 = vmatpush1.msra.mxu0 0.0
        %1321 = vmatprep.mubr.f32.mxu0 0.0
        %1322 = vmatmul.mubr.f32.gmra.mrb[0].mxu0 %v925
        %v1323 = vpop.f32.mrb[0].mxu0
        %v1324 = vadd.f32 0.0, %v1323
        %v1325 = vpop.f32.mrb[0].mxu0
        %1326 = vmatprep.mubr.f32.mxu0 0.0
        %1327 = vmatmul.mubr.f32.gmra.mrb[0].mxu0 %v927
        %v1328 = vpop.f32.mrb[0].mxu0
        %v1329 = vadd.f32 0.0, %v1328
        %v1330 = vpop.f32.mrb[0].mxu0
        %1331 = vdwg.mxu0
        %v1332 = vadd.f32 %v1024, %v1099
        %v1333 = vadd.f32 %v1025, %v1104
        %v1334 = vadd.f32 %v1026, %v1174
        %v1335 = vadd.f32 %v1027, %v1179
        %v1336 = vadd.f32 %v1028, %v1249
        %v1337 = vadd.f32 %v1029, %v1254
        %v1338 = vadd.f32 %v1030, %v1324
        %v1339 = vadd.f32 %v1031, %v1329
        %1340 = vst.msk [vmem:[#allocation4] sm:$0xff] %vm392, %v1332
        %1341 = vst.msk [vmem:[#allocation4 + $0x8] sm:$0xff] %vm392, %v1333
        %1342 = vst.msk [vmem:[#allocation4 + $0x10] sm:$0xff] %vm392, %v1334
        %1343 = vst.msk [vmem:[#allocation4 + $0x18] sm:$0xff] %vm392, %v1335
        %1344 = vst.msk [vmem:[#allocation4 + $0x20] sm:$0xff] %vm392, %v1336
        %1345 = vst.msk [vmem:[#allocation4 + $0x28] sm:$0xff] %vm392, %v1337
        %1346 = vst.msk [vmem:[#allocation4 + $0x30] sm:$0xff] %vm392, %v1338
        %1347 = vst.msk [vmem:[#allocation4 + $0x38] sm:$0xff] %vm392, %v1339
        %1348 = vst.msk [vmem:[#allocation2] sm:$0xff] %vm375, %v832
        %1349 = vst.msk [vmem:[#allocation2 + $0x8] sm:$0xff] %vm375, %v833
        %1350 = vst.msk [vmem:[#allocation2 + $0x10] sm:$0xff] %vm375, %v834
        %1351 = vst.msk [vmem:[#allocation2 + $0x18] sm:$0xff] %vm375, %v835
        %1352 = vst.msk [vmem:[#allocation2 + $0x20] sm:$0xff] %vm375, %v836
        %1353 = vst.msk [vmem:[#allocation2 + $0x28] sm:$0xff] %vm375, %v837
        %1354 = vst.msk [vmem:[#allocation2 + $0x30] sm:$0xff] %vm375, %v838
        %1355 = vst.msk [vmem:[#allocation2 + $0x38] sm:$0xff] %vm375, %v839
        %v1356 = vld [vmem:[#allocation4] sm:$0xff]
        %v1357 = vld [vmem:[#allocation4 + $0x8] sm:$0xff]
        %v1358 = vld [vmem:[#allocation4 + $0x10] sm:$0xff]
        %v1359 = vld [vmem:[#allocation4 + $0x18] sm:$0xff]
        %v1360 = vld [vmem:[#allocation4 + $0x20] sm:$0xff]
        %v1361 = vld [vmem:[#allocation4 + $0x28] sm:$0xff]
        %v1362 = vld [vmem:[#allocation4 + $0x30] sm:$0xff]
        %v1363 = vld [vmem:[#allocation4 + $0x38] sm:$0xff]
        %v1364 = vld [vmem:[#allocation3] sm:$0xff]
        %v1365 = vld [vmem:[#allocation3 + $0x8] sm:$0xff]
        %v1366 = vld [vmem:[#allocation3 + $0x10] sm:$0xff]
        %v1367 = vld [vmem:[#allocation3 + $0x18] sm:$0xff]
        %v1368 = vld [vmem:[#allocation3 + $0x20] sm:$0xff]
        %v1369 = vld [vmem:[#allocation3 + $0x28] sm:$0xff]
        %v1370 = vld [vmem:[#allocation3 + $0x30] sm:$0xff]
        %v1371 = vld [vmem:[#allocation3 + $0x38] sm:$0xff]
        %v1372 = vrcp.pop %v1364
        %v1373 = vrcp.pop %v1365
        %v1374 = vrcp.pop %v1366
        %v1375 = vrcp.pop %v1367
        %v1376 = vrcp.pop %v1368
        %v1377 = vrcp.pop %v1369
        %v1378 = vrcp.pop %v1370
        %v1379 = vrcp.pop %v1371
        %1381 = vset.pattern.permute.xlu0 0
        %1382 = vperm.xlu0 %1381, %v1372
        %v1383 = vpop.permute.xlu0 %1382
        %1386 = vset.pattern.permute.xlu0 0
        %1387 = vperm.xlu0 %1386, %v1373
        %v1388 = vpop.permute.xlu0 %1387
        %1391 = vset.pattern.permute.xlu0 0
        %1392 = vperm.xlu0 %1391, %v1374
        %v1393 = vpop.permute.xlu0 %1392
        %1396 = vset.pattern.permute.xlu0 0
        %1397 = vperm.xlu0 %1396, %v1375
        %v1398 = vpop.permute.xlu0 %1397
        %1401 = vset.pattern.permute.xlu0 0
        %1402 = vperm.xlu0 %1401, %v1376
        %v1403 = vpop.permute.xlu0 %1402
        %1406 = vset.pattern.permute.xlu0 0
        %1407 = vperm.xlu0 %1406, %v1377
        %v1408 = vpop.permute.xlu0 %1407
        %1411 = vset.pattern.permute.xlu0 0
        %1412 = vperm.xlu0 %1411, %v1378
        %v1413 = vpop.permute.xlu0 %1412
        %1416 = vset.pattern.permute.xlu0 0
        %1417 = vperm.xlu0 %1416, %v1379
        %v1418 = vpop.permute.xlu0 %1417
        %v1420 = vmul.f32 %v1356, %v1383
        %v1421 = vmul.f32 %v1357, %v1388
        %v1422 = vmul.f32 %v1358, %v1393
        %v1423 = vmul.f32 %v1359, %v1398
        %v1424 = vmul.f32 %v1360, %v1403
        %v1425 = vmul.f32 %v1361, %v1408
        %v1426 = vmul.f32 %v1362, %v1413
        %v1427 = vmul.f32 %v1363, %v1418
        %1428 = vst.msk [vmem:[#allocation5] sm:$0xff] %vm392, %v1420
        %1429 = vst.msk [vmem:[#allocation5 + $0x8] sm:$0xff] %vm392, %v1421
        %1432 = vrot.lane.b32.xlu0 %v1422, 16
        %v1433 = vpop.permute.xlu0 %1432
        %1434 = vrot.lane.b32.xlu0 %v1423, 16
        %v1435 = vpop.permute.xlu0 %1434
        %vm1438 = vcmask 261248
        %1439 = vst.msk [vmem:[#allocation5] sm:$0xff] %vm1438, %v1433
        %1440 = vst.msk [vmem:[#allocation5 + $0x8] sm:$0xff] %vm1438, %v1435
        %1443 = vrot.lane.b32.xlu0 %v1424, 32
        %v1444 = vpop.permute.xlu0 %1443
        %1445 = vrot.lane.b32.xlu0 %v1425, 32
        %v1446 = vpop.permute.xlu0 %1445
        %vm1449 = vcmask 392448
        %1450 = vst.msk [vmem:[#allocation5] sm:$0xff] %vm1449, %v1444
        %1451 = vst.msk [vmem:[#allocation5 + $0x8] sm:$0xff] %vm1449, %v1446
        %1454 = vrot.lane.b32.xlu0 %v1426, 48
        %v1455 = vpop.permute.xlu0 %1454
        %1456 = vrot.lane.b32.xlu0 %v1427, 48
        %v1457 = vpop.permute.xlu0 %1456
        %vm1460 = vcmask 523648
        %1461 = vst.msk [vmem:[#allocation5] sm:$0xff] %vm1460, %v1455
        %1462 = vst.msk [vmem:[#allocation5 + $0x8] sm:$0xff] %vm1460, %v1457
        %v1463 = vld [vmem:[#allocation5] sm:$0xff]
        %v1464 = vld [vmem:[#allocation5 + $0x8] sm:$0xff]
        %v1465 = vld [vmem:[#allocation12] sm:$0xff]
        %v1466 = vld [vmem:[#allocation12 + $0x8] sm:$0xff]
        %v1467 = vld [vmem:[#allocation12 + $0x10] sm:$0xff]
        %v1468 = vld [vmem:[#allocation12 + $0x18] sm:$0xff]
        %v1469 = vld [vmem:[#allocation12 + $0x20] sm:$0xff]
        %v1470 = vld [vmem:[#allocation12 + $0x28] sm:$0xff]
        %v1471 = vld [vmem:[#allocation12 + $0x30] sm:$0xff]
        %v1472 = vld [vmem:[#allocation12 + $0x38] sm:$0xff]
        %v1473 = vld [vmem:[#allocation14] sm:$0x1]
        %v1475 = vlaneseq
        %v1476 = vshrl.u32 %v1475, 7
        %v1477 = vsub.s32 0, %v1476
        %v1478 = vrot.slane %v1473, %v1477
        %vm1480 = vcmask 523264
        %v1482 = vsel %vm1480, %v1463, 0
        %v1485 = vsel %vm1480, %v1464, 0
        %1487 = vmatprep.subr.mxu0 0.0
        %1488 = vmatpush1.msra.mxu0 %v1465
        %1489 = vmatprep.subr.mxu0 0.0
        %1490 = vmatpush1.msra.mxu0 %v1466
        %1491 = vmatprep.subr.mxu0 0.0
        %1492 = vmatpush1.msra.mxu0 %v1467
        %1493 = vmatprep.subr.mxu0 0.0
        %1494 = vmatpush1.msra.mxu0 %v1468
        %1495 = vmatprep.subr.mxu0 0.0
        %1496 = vmatpush1.msra.mxu0 %v1469
        %1497 = vmatprep.subr.mxu0 0.0
        %1498 = vmatpush1.msra.mxu0 %v1470
        %1499 = vmatprep.subr.mxu0 0.0
        %1500 = vmatpush1.msra.mxu0 %v1471
        %1501 = vmatprep.subr.mxu0 0.0
        %1502 = vmatpush1.msra.mxu0 %v1472
        %1503 = vmatprep.subr.mxu0 0.0
        %1504 = vmatpush1.msra.mxu0 0.0
        %1505 = vmatprep.subr.mxu0 0.0
        %1506 = vmatpush1.msra.mxu0 0.0
        %1507 = vmatprep.subr.mxu0 0.0
        %1508 = vmatpush1.msra.mxu0 0.0
        %1509 = vmatprep.subr.mxu0 0.0
        %1510 = vmatpush1.msra.mxu0 0.0
        %1511 = vmatprep.subr.mxu0 0.0
        %1512 = vmatpush1.msra.mxu0 0.0
        %1513 = vmatprep.subr.mxu0 0.0
        %1514 = vmatpush1.msra.mxu0 0.0
        %1515 = vmatprep.subr.mxu0 0.0
        %1516 = vmatpush1.msra.mxu0 0.0
        %1517 = vmatprep.subr.mxu0 0.0
        %1518 = vmatpush1.msra.mxu0 0.0
        %1519 = vmatprep.subr.mxu0 0.0
        %1520 = vmatpush1.msra.mxu0 0.0
        %1521 = vmatprep.subr.mxu0 0.0
        %1522 = vmatpush1.msra.mxu0 0.0
        %1523 = vmatprep.subr.mxu0 0.0
        %1524 = vmatpush1.msra.mxu0 0.0
        %1525 = vmatprep.subr.mxu0 0.0
        %1526 = vmatpush1.msra.mxu0 0.0
        %1527 = vmatprep.subr.mxu0 0.0
        %1528 = vmatpush1.msra.mxu0 0.0
        %1529 = vmatprep.subr.mxu0 0.0
        %1530 = vmatpush1.msra.mxu0 0.0
        %1531 = vmatprep.subr.mxu0 0.0
        %1532 = vmatpush1.msra.mxu0 0.0
        %1533 = vmatprep.subr.mxu0 0.0
        %1534 = vmatpush1.msra.mxu0 0.0
        %1535 = vmatprep.subr.mxu0 0.0
        %1536 = vmatpush1.msra.mxu0 0.0
        %1537 = vmatprep.subr.mxu0 0.0
        %1538 = vmatpush1.msra.mxu0 0.0
        %1539 = vmatprep.subr.mxu0 0.0
        %1540 = vmatpush1.msra.mxu0 0.0
        %1541 = vmatprep.subr.mxu0 0.0
        %1542 = vmatpush1.msra.mxu0 0.0
        %1543 = vmatprep.subr.mxu0 0.0
        %1544 = vmatpush1.msra.mxu0 0.0
        %1545 = vmatprep.subr.mxu0 0.0
        %1546 = vmatpush1.msra.mxu0 0.0
        %1547 = vmatprep.subr.mxu0 0.0
        %1548 = vmatpush1.msra.mxu0 0.0
        %1549 = vmatprep.subr.mxu0 0.0
        %1550 = vmatpush1.msra.mxu0 0.0
        %1551 = vmatprep.mubr.f32.mxu0 0.0
        %1552 = vmatmul.mubr.f32.gmra.mrb[0].mxu0 %v1482
        %v1553 = vpop.f32.mrb[0].mxu0
        %v1554 = vadd.f32 %v1478, %v1553
        %v1555 = vpop.f32.mrb[0].mxu0
        %1556 = vmatprep.mubr.f32.mxu0 0.0
        %1557 = vmatmul.mubr.f32.gmra.mrb[0].mxu0 %v1485
        %v1558 = vpop.f32.mrb[0].mxu0
        %v1559 = vadd.f32 %v1478, %v1558
        %v1560 = vpop.f32.mrb[0].mxu0
        %1561 = vdwg.mxu0
        %vm1562 = vcmask 261120
        %1563 = vst.msk [vmem:[%s364] sm:$0xff] %vm1562, %v1554
        %1564 = vst.msk [vmem:[%s364 + $0x8] sm:$0xff] %vm1562, %v1559
        %s1565 = sand.u32 %s170, 1
        %s1566 = scalar_lea.sflag [#allocation8], %s1565
        %s1567 = sand.u32 %s170, 1
        %s1568 = smul.addr %s1567, 16
        %s1569 = scalar_lea.vmem [#allocation15], %s1568
        // Predicated region
        $region61: #{tpu_custom_call.1} parent=39 // pred_check
          %p1570 = pneg %p180
        $region62: #{tpu_custom_call.1} parent=39 // pred_check_branch
          %1572 = sbr.rel (%p1570) target = $region64
        $region63: #{tpu_custom_call.1} parent=39 // pred_region
          %s1573 = smul.u32 2, %s31
          %s1575 = ssub.s32 256, 256
          %1576 = vsyncadd %s1566, %s1575
          %s1577 = smul.addr %s30, 2
          %s1578 = sadd.s32 %s1573, %s1577
          %s1579 = smul.addr %s1578, 128
          %s1580 = scalar_lea.hbm %s5, %s1579
          %s1581 = sshll.u32 %s1569, 4
          %s1582 = int_to_ptr.vmem [resolvable:$true] %s1581
          %1587 = dma.vmem_to_hbm [thread:$0]  %s1582, 256, %s1580, %s1566, 128, 128, 8
        $region64: #{tpu_custom_call.1} parent=39 // pred_fallthru
          _
      $region40: #{tpu_custom_call.1} parent=5 // pred_fallthru
        _
      %p1588 = scmp.le.s32.totalorder 2, %s21
      // Predicated region
      $region65: #{tpu_custom_call.1} parent=5 // pred_check
        %p1589 = pneg %p1588
      $region66: #{tpu_custom_call.1} parent=5 // pred_check_branch
        %1591 = sbr.rel (%p1589) target = $region68
      $region67: #{tpu_custom_call.1} parent=5 // pred_region
        %s1592 = ssub.s32 %s21, 2
        // Predicated region
        $region69: #{tpu_custom_call.1} parent=67 // pred_check
          %p1593 = pneg %p186
        $region70: #{tpu_custom_call.1} parent=67 // pred_check_branch
          %1595 = sbr.rel (%p1593) target = $region72
        $region71: #{tpu_custom_call.1} parent=67 // pred_region
          %s1596 = sand.u32 %s171, 1
          %s1597 = scalar_lea.sflag [#allocation8], %s1596
          %s1598 = sand.u32 %s171, 1
          %s1599 = smul.addr %s1598, 16
          %s1600 = scalar_lea.vmem [#allocation15], %s1599
          %1601 = dma.done %s1597, 256
        $region72: #{tpu_custom_call.1} parent=67 // pred_fallthru
          _
      $region68: #{tpu_custom_call.1} parent=5 // pred_fallthru
        _
    $region6: #{tpu_custom_call.1} parent=1 // loop_footer
      %s25 = sadd.s32 1, %s21
    $region7: #{tpu_custom_call.1} parent=1 // loop_footer_branch
      %20 = sbr.rel target = $region3
    $region8: #{tpu_custom_call.1} parent=1 // loop_exit
      _
    %1602 = vsyncpa [#allocation7], 1
    %s1603 = scalar_lea.sflag [#allocation7], 1
    %1604 = vsyncpa %s1603, 1
    %1605 = vsyncpa [#allocation10], 1
    %s1606 = scalar_lea.sflag [#allocation10], 1
    %1607 = vsyncpa %s1606, 1
    %1608 = vsyncpa [#allocation13], 1
    %1609 = vsyncpa [#allocation8], 1
    %s1610 = scalar_lea.sflag [#allocation8], 1
    %1611 = vsyncpa %s1610, 1

</llo_original>
